<compile_context>
chip_gen: v7x
topology: tpu7x:2x2x1
jax: 0.10.0
libtpu: 0.0.40
codegen_flags: <defaults>
</compile_context>

<pallas_src>
import jax
import jax.numpy as jnp
from jax import lax
from jax.experimental import pallas as pl
from jax.experimental.pallas import tpu as pltpu


def _round_up(a, m):
    return (a + m - 1) // m * m


def mlp_noise_predictor_kernel(xp_ref, w1_ref, b1_ref, g_ref, beta_ref,
                               w2_ref, b2_ref, w3_ref, b3_ref, o_ref):
    xp = xp_ref[...]                                     # (TB, 128) f32: [x, t/30, 0...]

    # Linear(dim+1, 512) — lane-padded input, K=128 on the MXU.
    h = jnp.dot(xp.astype(jnp.bfloat16), w1_ref[...],
                preferred_element_type=jnp.float32)
    h = h + b1_ref[...]

    # LayerNorm(512), eps=1e-5, affine — single fused reduction pass,
    # variance clamped to >= 0 to guard the one-pass formula.
    inv_n = 1.0 / h.shape[-1]
    s1 = jnp.sum(h, axis=-1, keepdims=True)
    s2 = jnp.sum(h * h, axis=-1, keepdims=True)
    mean = s1 * inv_n
    var = jnp.maximum(s2 * inv_n - mean * mean, 0.0)
    h = (h - mean) * lax.rsqrt(var + 1e-5)
    h = h * g_ref[...] + beta_ref[...]

    # ReLU
    h = jnp.maximum(h, 0.0)

    # Dropout(0.2): identity at inference.
    # TODO(synk): training-mode dropout (pltpu.prng_seed/prng_random_bits mask).

    # Linear(512, 512) + ReLU   (bf16 MXU operands, f32 accumulate)
    h = jnp.dot(h.astype(jnp.bfloat16), w2_ref[...],
                preferred_element_type=jnp.float32) + b2_ref[...]
    h = jnp.maximum(h, 0.0)

    # Linear(512, dim) — w3/out lane-padded to 128 for lane-dense stores.
    o_ref[...] = (jnp.dot(h.astype(jnp.bfloat16), w3_ref[...],
                          preferred_element_type=jnp.float32)
                  + b3_ref[...]).astype(o_ref.dtype)


def prepare_params(params, dim):
    """Zero-pad / cast the f32 PyTorch-layout params for the kernel (one-time)."""
    w1, b1, g, beta, w2, b2, w3, b3 = params
    hidden = w2.shape[0]
    in_pad = max(128, _round_up(dim + 1, 128))
    dim_pad = max(128, _round_up(dim, 128))

    # Full (dim+1, hidden) w1 padded to (in_pad, hidden); padded rows are zero so
    # the zero lanes of x_pad contribute nothing.
    w1p = jnp.zeros((in_pad, hidden), jnp.float32).at[:dim + 1].set(w1)
    w1p = w1p.astype(jnp.bfloat16)

    w3p = jnp.zeros((hidden, dim_pad), jnp.float32).at[:, :dim].set(w3)
    w3p = w3p.astype(jnp.bfloat16)
    b3p = jnp.zeros((1, dim_pad), jnp.float32).at[:, :dim].set(b3)
    return (w1p, b1, g, beta, w2.astype(jnp.bfloat16), b2, w3p, b3p)


def mlp_noise_predictor(x, t, kparams):
    """x: (B, dim) f32, t: (B,) int/float timesteps. Returns (B, dim) f32."""
    B, dim = x.shape
    w1p, b1, g, beta, w2, b2, w3p, b3p = kparams
    hidden = w2.shape[0]
    in_pad = w1p.shape[0]
    dim_pad = w3p.shape[1]

    # Tile sizing: >=2 grid steps when B allows (v7x has 2 TensorCores), tiles of
    # at most ~512 rows, multiples of 8, with minimal batch padding.
    MAX_TILE = 512
    n_tiles = max(2, pl.cdiv(B, MAX_TILE))
    TILE_B = max(8, _round_up(pl.cdiv(B, n_tiles), 8))
    B_pad = _round_up(B, TILE_B)
    grid = (B_pad // TILE_B,)

    # Build lane-padded input [x | t/30 | zeros] of width 128.
    t_col = (t.astype(jnp.float32) / 30.0).reshape(B, 1)
    xp = jnp.zeros((B_pad, in_pad), jnp.float32)
    xp = xp.at[:B, :dim].set(x.astype(jnp.float32))
    xp = xp.at[:B, dim:dim + 1].set(t_col)

    def row_tile(shape):
        return pl.BlockSpec(shape, lambda i: (i, 0))

    def resident(shape):
        # Same block every grid step -> stays VMEM-resident; single buffer suffices.
        return pl.BlockSpec(shape, lambda i: (0, 0), pipeline_mode=pl.Buffered(1))

    out = pl.pallas_call(
        mlp_noise_predictor_kernel,
        out_shape=jax.ShapeDtypeStruct((B_pad, dim_pad), jnp.float32),
        grid=grid,
        in_specs=[
            row_tile((TILE_B, in_pad)),       # x_pad
            resident((in_pad, hidden)),       # w1 (padded)   bf16
            resident((1, hidden)),            # b1
            resident((1, hidden)),            # LN gamma
            resident((1, hidden)),            # LN beta
            resident((hidden, hidden)),       # w2            bf16
            resident((1, hidden)),            # b2
            resident((hidden, dim_pad)),      # w3 (padded)   bf16
            resident((1, dim_pad)),           # b3 (padded)
        ],
        out_specs=row_tile((TILE_B, dim_pad)),
        compiler_params=pltpu.CompilerParams(
            dimension_semantics=("parallel",),
            vmem_limit_bytes=32 * 1024 * 1024,
        ),
    )(xp, w1p, b1, g, beta, w2, b2, w3p, b3p)

    return out[:B, :dim]


def init_params(key, dim, hidden=512):
    ks = jax.random.split(key, 3)

    def lin(k, fan_in, fan_out):
        bound = 1.0 / jnp.sqrt(fan_in)
        kw, kb = jax.random.split(k)
        w = jax.random.uniform(kw, (fan_in, fan_out), jnp.float32, -bound, bound)
        b = jax.random.uniform(kb, (1, fan_out), jnp.float32, -bound, bound)
        return w, b

    w1, b1 = lin(ks[0], dim + 1, hidden)
    g = jnp.ones((1, hidden), jnp.float32)       # LayerNorm weight
    beta = jnp.zeros((1, hidden), jnp.float32)   # LayerNorm bias
    w2, b2 = lin(ks[1], hidden, hidden)
    w3, b3 = lin(ks[2], hidden, dim)
    return (w1, b1, g, beta, w2, b2, w3, b3)


def reference_forward(x, t, kparams, dim):
    """Pure-JAX reference using the same bf16-rounded padded weights the kernel
    consumes (f32 accumulation), mirroring the module's forward semantics."""
    w1p, b1, g, beta, w2, b2, w3p, b3p = kparams
    in_pad = w1p.shape[0]
    B = x.shape[0]

    t_col = (t.astype(jnp.float32) / 30.0).reshape(B, 1)
    xp = jnp.zeros((B, in_pad), jnp.float32)
    xp = xp.at[:, :dim].set(x.astype(jnp.float32))
    xp = xp.at[:, dim:dim + 1].set(t_col)

    h = xp.astype(jnp.bfloat16).astype(jnp.float32) @ w1p.astype(jnp.float32) + b1
    mean = h.mean(-1, keepdims=True)
    var = ((h - mean) ** 2).mean(-1, keepdims=True)
    h = (h - mean) / jnp.sqrt(var + 1e-5) * g + beta
    h = jnp.maximum(h, 0.0)
    h = jnp.maximum(
        h.astype(jnp.bfloat16).astype(jnp.float32) @ w2.astype(jnp.float32) + b2, 0.0)
    out = h.astype(jnp.bfloat16).astype(jnp.float32) @ w3p.astype(jnp.float32) + b3p
    return out[:, :dim]


if __name__ == "__main__":
    key = jax.random.PRNGKey(0)
    kx, kt, kp = jax.random.split(key, 3)

    B, dim = 8, 32
    x = jax.random.normal(kx, (B, dim), jnp.float32)
    t = jax.random.randint(kt, (B,), 0, 30)          # integer timesteps, like torch usage

    params = init_params(kp, dim)
    kparams = prepare_params(params, dim)

    out = mlp_noise_predictor(x, t, kparams)
    out = jax.block_until_ready(out)

    ref = reference_forward(x, t, kparams, dim)
    assert out.shape == (B, dim)
    assert jnp.allclose(out, ref, atol=1e-2, rtol=1e-2), "mismatch vs JAX reference"

    print("KERNEL_OK")
</pallas_src>

<mosaic_0001>
module attributes {stable_mosaic.version = 11 : i64} {
  func.func @mlp_noise_predictor_kernel(%arg0: i32, %arg1: memref<8x128xf32, #tpu.memory_space<vmem>>, %arg2: memref<128x512xbf16, #tpu.memory_space<vmem>>, %arg3: memref<1x512xf32, #tpu.memory_space<vmem>>, %arg4: memref<1x512xf32, #tpu.memory_space<vmem>>, %arg5: memref<1x512xf32, #tpu.memory_space<vmem>>, %arg6: memref<512x512xbf16, #tpu.memory_space<vmem>>, %arg7: memref<1x512xf32, #tpu.memory_space<vmem>>, %arg8: memref<512x128xbf16, #tpu.memory_space<vmem>>, %arg9: memref<1x128xf32, #tpu.memory_space<vmem>>, %arg10: memref<8x128xf32, #tpu.memory_space<vmem>>) attributes {dimension_semantics = [#tpu.dimension_semantics<parallel>], iteration_bounds = array<i64: 1>, scalar_prefetch = 0 : i64, scratch_operands = 0 : i64, tpu.core_type = #tpu.core_type<tc>, window_params = [{transform_indices = @transform_0, window_bounds = array<i64: 8, 128>}, {pipeline_mode = #tpu.pipeline_mode<synchronous>, transform_indices = @transform_1, window_bounds = array<i64: 128, 512>}, {pipeline_mode = #tpu.pipeline_mode<synchronous>, transform_indices = @transform_2, window_bounds = array<i64: 1, 512>}, {pipeline_mode = #tpu.pipeline_mode<synchronous>, transform_indices = @transform_3, window_bounds = array<i64: 1, 512>}, {pipeline_mode = #tpu.pipeline_mode<synchronous>, transform_indices = @transform_4, window_bounds = array<i64: 1, 512>}, {pipeline_mode = #tpu.pipeline_mode<synchronous>, transform_indices = @transform_5, window_bounds = array<i64: 512, 512>}, {pipeline_mode = #tpu.pipeline_mode<synchronous>, transform_indices = @transform_6, window_bounds = array<i64: 1, 512>}, {pipeline_mode = #tpu.pipeline_mode<synchronous>, transform_indices = @transform_7, window_bounds = array<i64: 512, 128>}, {pipeline_mode = #tpu.pipeline_mode<synchronous>, transform_indices = @transform_8, window_bounds = array<i64: 1, 128>}, {transform_indices = @transform_9, window_bounds = array<i64: 8, 128>}]} {
    %c0 = arith.constant 0 : index
    %c0_0 = arith.constant 0 : index
    %0 = vector.load %arg1[%c0, %c0_0] : memref<8x128xf32, #tpu.memory_space<vmem>>, vector<8x128xf32>
    %1 = arith.truncf %0 : vector<8x128xf32> to vector<8x128xbf16>
    %c0_1 = arith.constant 0 : index
    %c0_2 = arith.constant 0 : index
    %2 = vector.load %arg2[%c0_1, %c0_2] : memref<128x512xbf16, #tpu.memory_space<vmem>>, vector<128x512xbf16>
    %cst = arith.constant dense<0.000000e+00> : vector<8x512xf32>
    %3 = tpu.matmul %1, %2, %cst {dimension_numbers = #tpu.dot_dimension_numbers<[1], [0], [0], [1], [0, 0, 1, 1], [], []>} : vector<8x128xbf16>, vector<128x512xbf16>, vector<8x512xf32> -> vector<8x512xf32>
    %c0_3 = arith.constant 0 : index
    %c0_4 = arith.constant 0 : index
    %4 = vector.load %arg3[%c0_3, %c0_4] : memref<1x512xf32, #tpu.memory_space<vmem>>, vector<1x512xf32>
    %5 = vector.broadcast %4 : vector<1x512xf32> to vector<8x512xf32>
    %6 = arith.addf %3, %5 : vector<8x512xf32>
    %cst_5 = arith.constant dense<0.000000e+00> : vector<8xf32>
    %7 = vector.multi_reduction <add>, %6, %cst_5 [1] : vector<8x512xf32> to vector<8xf32>
    %8 = vector.shape_cast %7 : vector<8xf32> to vector<8x1xf32>
    %9 = arith.mulf %6, %6 : vector<8x512xf32>
    %cst_6 = arith.constant dense<0.000000e+00> : vector<8xf32>
    %10 = vector.multi_reduction <add>, %9, %cst_6 [1] : vector<8x512xf32> to vector<8xf32>
    %11 = vector.shape_cast %10 : vector<8xf32> to vector<8x1xf32>
    %cst_7 = arith.constant 0.001953125 : f32
    %12 = vector.broadcast %cst_7 : f32 to vector<8x1xf32>
    %13 = arith.mulf %8, %12 : vector<8x1xf32>
    %cst_8 = arith.constant 0.001953125 : f32
    %14 = vector.broadcast %cst_8 : f32 to vector<8x1xf32>
    %15 = arith.mulf %11, %14 : vector<8x1xf32>
    %16 = arith.mulf %13, %13 : vector<8x1xf32>
    %17 = arith.subf %15, %16 : vector<8x1xf32>
    %cst_9 = arith.constant 0.000000e+00 : f32
    %18 = vector.broadcast %cst_9 : f32 to vector<8x1xf32>
    %19 = arith.maximumf %17, %18 : vector<8x1xf32>
    %20 = vector.broadcast %13 : vector<8x1xf32> to vector<8x512xf32>
    %21 = arith.subf %6, %20 : vector<8x512xf32>
    %cst_10 = arith.constant 9.99999974E-6 : f32
    %22 = vector.broadcast %cst_10 : f32 to vector<8x1xf32>
    %23 = arith.addf %19, %22 : vector<8x1xf32>
    %24 = math.rsqrt %23 : vector<8x1xf32>
    %25 = vector.broadcast %24 : vector<8x1xf32> to vector<8x512xf32>
    %26 = arith.mulf %21, %25 : vector<8x512xf32>
    %c0_11 = arith.constant 0 : index
    %c0_12 = arith.constant 0 : index
    %27 = vector.load %arg4[%c0_11, %c0_12] : memref<1x512xf32, #tpu.memory_space<vmem>>, vector<1x512xf32>
    %28 = vector.broadcast %27 : vector<1x512xf32> to vector<8x512xf32>
    %29 = arith.mulf %26, %28 : vector<8x512xf32>
    %c0_13 = arith.constant 0 : index
    %c0_14 = arith.constant 0 : index
    %30 = vector.load %arg5[%c0_13, %c0_14] : memref<1x512xf32, #tpu.memory_space<vmem>>, vector<1x512xf32>
    %31 = vector.broadcast %30 : vector<1x512xf32> to vector<8x512xf32>
    %32 = arith.addf %29, %31 : vector<8x512xf32>
    %cst_15 = arith.constant 0.000000e+00 : f32
    %33 = vector.broadcast %cst_15 : f32 to vector<8x512xf32>
    %34 = arith.maximumf %32, %33 : vector<8x512xf32>
    %35 = arith.truncf %34 : vector<8x512xf32> to vector<8x512xbf16>
    %c0_16 = arith.constant 0 : index
    %c0_17 = arith.constant 0 : index
    %36 = vector.load %arg6[%c0_16, %c0_17] : memref<512x512xbf16, #tpu.memory_space<vmem>>, vector<512x512xbf16>
    %cst_18 = arith.constant dense<0.000000e+00> : vector<8x512xf32>
    %37 = tpu.matmul %35, %36, %cst_18 {dimension_numbers = #tpu.dot_dimension_numbers<[1], [0], [0], [1], [0, 0, 1, 1], [], []>} : vector<8x512xbf16>, vector<512x512xbf16>, vector<8x512xf32> -> vector<8x512xf32>
    %c0_19 = arith.constant 0 : index
    %c0_20 = arith.constant 0 : index
    %38 = vector.load %arg7[%c0_19, %c0_20] : memref<1x512xf32, #tpu.memory_space<vmem>>, vector<1x512xf32>
    %39 = vector.broadcast %38 : vector<1x512xf32> to vector<8x512xf32>
    %40 = arith.addf %37, %39 : vector<8x512xf32>
    %cst_21 = arith.constant 0.000000e+00 : f32
    %41 = vector.broadcast %cst_21 : f32 to vector<8x512xf32>
    %42 = arith.maximumf %40, %41 : vector<8x512xf32>
    %43 = arith.truncf %42 : vector<8x512xf32> to vector<8x512xbf16>
    %c0_22 = arith.constant 0 : index
    %c0_23 = arith.constant 0 : index
    %44 = vector.load %arg8[%c0_22, %c0_23] : memref<512x128xbf16, #tpu.memory_space<vmem>>, vector<512x128xbf16>
    %cst_24 = arith.constant dense<0.000000e+00> : vector<8x128xf32>
    %45 = tpu.matmul %43, %44, %cst_24 {dimension_numbers = #tpu.dot_dimension_numbers<[1], [0], [0], [1], [0, 0, 1, 1], [], []>} : vector<8x512xbf16>, vector<512x128xbf16>, vector<8x128xf32> -> vector<8x128xf32>
    %c0_25 = arith.constant 0 : index
    %c0_26 = arith.constant 0 : index
    %46 = vector.load %arg9[%c0_25, %c0_26] : memref<1x128xf32, #tpu.memory_space<vmem>>, vector<1x128xf32>
    %47 = vector.broadcast %46 : vector<1x128xf32> to vector<8x128xf32>
    %48 = arith.addf %45, %47 : vector<8x128xf32>
    %c0_27 = arith.constant 0 : index
    %c0_28 = arith.constant 0 : index
    %49 = vector.load %arg10[%c0_27, %c0_28] : memref<8x128xf32, #tpu.memory_space<vmem>>, vector<8x128xf32>
    tpu.vector_store %arg10[%c0_27, %c0_28], %48 {strides = array<i32>} : memref<8x128xf32, #tpu.memory_space<vmem>>, vector<8x128xf32>,
    return
  }
  func.func @transform_0(%arg0: i32) -> (i32, i32) {
    %c0_i32 = arith.constant 0 : i32
    %c0_i32_0 = arith.constant 0 : i32
    return %arg0, %c0_i32 : i32, i32
  }
  func.func @transform_1(%arg0: i32) -> (i32, i32) {
    %c0_i32 = arith.constant 0 : i32
    %c0_i32_0 = arith.constant 0 : i32
    %c0_i32_1 = arith.constant 0 : i32
    return %c0_i32, %c0_i32_0 : i32, i32
  }
  func.func @transform_2(%arg0: i32) -> (i32, i32) {
    %c0_i32 = arith.constant 0 : i32
    %c0_i32_0 = arith.constant 0 : i32
    %c0_i32_1 = arith.constant 0 : i32
    return %c0_i32, %c0_i32_0 : i32, i32
  }
  func.func @transform_3(%arg0: i32) -> (i32, i32) {
    %c0_i32 = arith.constant 0 : i32
    %c0_i32_0 = arith.constant 0 : i32
    %c0_i32_1 = arith.constant 0 : i32
    return %c0_i32, %c0_i32_0 : i32, i32
  }
  func.func @transform_4(%arg0: i32) -> (i32, i32) {
    %c0_i32 = arith.constant 0 : i32
    %c0_i32_0 = arith.constant 0 : i32
    %c0_i32_1 = arith.constant 0 : i32
    return %c0_i32, %c0_i32_0 : i32, i32
  }
  func.func @transform_5(%arg0: i32) -> (i32, i32) {
    %c0_i32 = arith.constant 0 : i32
    %c0_i32_0 = arith.constant 0 : i32
    %c0_i32_1 = arith.constant 0 : i32
    return %c0_i32, %c0_i32_0 : i32, i32
  }
  func.func @transform_6(%arg0: i32) -> (i32, i32) {
    %c0_i32 = arith.constant 0 : i32
    %c0_i32_0 = arith.constant 0 : i32
    %c0_i32_1 = arith.constant 0 : i32
    return %c0_i32, %c0_i32_0 : i32, i32
  }
  func.func @transform_7(%arg0: i32) -> (i32, i32) {
    %c0_i32 = arith.constant 0 : i32
    %c0_i32_0 = arith.constant 0 : i32
    %c0_i32_1 = arith.constant 0 : i32
    return %c0_i32, %c0_i32_0 : i32, i32
  }
  func.func @transform_8(%arg0: i32) -> (i32, i32) {
    %c0_i32 = arith.constant 0 : i32
    %c0_i32_0 = arith.constant 0 : i32
    %c0_i32_1 = arith.constant 0 : i32
    return %c0_i32, %c0_i32_0 : i32, i32
  }
  func.func @transform_9(%arg0: i32) -> (i32, i32) {
    %c0_i32 = arith.constant 0 : i32
    %c0_i32_0 = arith.constant 0 : i32
    return %arg0, %c0_i32 : i32, i32
  }
}

</mosaic_0001>

<llo_original>
// kernel: tpu_custom_call.1
$region0: #{tpu_custom_call.1}
  #allocation0 [shape = 'u32[]', space=smem, size = 0x4, offset = 0x4, fixed_abs, tag = 'smem constant byte address 0x4 - core index']
  #allocation1 [shape = 'u32[144,128]{1,0:T(1,128)}', space=vmem, size = 0x12000, scoped, tag = 'internal scratch']
  %s0 = inlined_call_operand.hbm [shape: f32[8,128], index: 0, kind: input, shape index: {}]
  %s1 = inlined_call_operand.hbm [shape: bf16[128,512], index: 1, kind: input, shape index: {}]
  %s2 = inlined_call_operand.vmem [shape: f32[1,512], index: 2, kind: input, shape index: {}]
  %s3 = inlined_call_operand.vmem [shape: f32[1,512], index: 3, kind: input, shape index: {}]
  %s4 = inlined_call_operand.vmem [shape: f32[1,512], index: 4, kind: input, shape index: {}]
  %s5 = inlined_call_operand.hbm [shape: bf16[512,512], index: 5, kind: input, shape index: {}]
  %s6 = inlined_call_operand.vmem [shape: f32[1,512], index: 6, kind: input, shape index: {}]
  %s7 = inlined_call_operand.hbm [shape: bf16[512,128], index: 7, kind: input, shape index: {}]
  %s8 = inlined_call_operand.vmem [shape: f32[1,128], index: 8, kind: input, shape index: {}]
  %s9 = inlined_call_operand.hbm [shape: f32[8,128], index: 9, kind: output, shape index: {}]
  %s10 = sld [smem:[#allocation0]]
  $region62: #{tpu_custom_call.1} parent=0
    _
  %s12 = ssub.s32 1, %s10
  %s13 = scalar_select 0, %s12, %s10
  $region1: #{tpu_custom_call.1} parent=0
    #allocation2 [shape = 'u8[4096]{0}', space=vmem, size = 0x1000, scoped, tag = 'input window, operand 0, single buffered']
    #allocation3 [shape = 's32[1]{0}', space=sflag, size = 0x4, scoped, tag = 'scoped memory for tpu_custom_call.1']
    #allocation4 [shape = 's32[1]{0}', space=sflag, size = 0x4, scoped, tag = 'scoped memory for tpu_custom_call.1']
    #allocation5 [shape = 'u8[131072]{0}', space=vmem, size = 0x20000, scoped, tag = 'input window, operand 1, single buffered']
    #allocation6 [shape = 's32[1]{0}', space=sflag, size = 0x4, scoped, tag = 'scoped memory for tpu_custom_call.1']
    #allocation7 [shape = 'u8[524288]{0}', space=vmem, size = 0x80000, scoped, tag = 'input window, operand 5, single buffered']
    #allocation8 [shape = 'u8[131072]{0}', space=vmem, size = 0x20000, scoped, tag = 'input window, operand 7, single buffered']
    #allocation9 [shape = 's32[1]{0}', space=sflag, size = 0x4, scoped, tag = 'scoped memory for tpu_custom_call.1']
    #allocation10 [shape = 'u8[4096]{0}', space=vmem, size = 0x1000, scoped, tag = 'output window, operand 0, single buffered']
    %14 = vsyncpa [#allocation3], 0
    %15 = vsyncpa [#allocation6], 0
    %16 = vsyncpa [#allocation9], 0
    %17 = vsyncpa [#allocation4], 0
    // Predicated region
    $region2: #{tpu_custom_call.1} parent=1 // pred_check
      _
    $region3: #{tpu_custom_call.1} parent=1 // pred_check_branch
      %19 = sbr.rel (0) target = $region5
    $region4: #{tpu_custom_call.1} parent=1 // pred_region
      %s21 = ssub.s32 128, 128
      %22 = vsyncadd [#allocation3], %s21
      %s24 = sshll.u32 [#allocation2], 4
      %s25 = int_to_ptr.vmem [resolvable:$true] %s24
      %27 = dma.hbm_to_vmem [thread:$0]  %s0, 128, %s25, [#allocation3]
    $region5: #{tpu_custom_call.1} parent=1 // pred_fallthru
      _
    // Predicated region
    $region6: #{tpu_custom_call.1} parent=1 // pred_check
      _
    $region7: #{tpu_custom_call.1} parent=1 // pred_check_branch
      %29 = sbr.rel (0) target = $region9
    $region8: #{tpu_custom_call.1} parent=1 // pred_region
      %s31 = ssub.s32 4096, 4096
      %32 = vsyncadd [#allocation6], %s31
      %s33 = sshll.u32 [#allocation5], 4
      %s34 = int_to_ptr.vmem [resolvable:$true] %s33
      %39 = dma.hbm_to_vmem [thread:$0]  %s1, 4096, %s34, [#allocation6], 256, 256, 16
    $region9: #{tpu_custom_call.1} parent=1 // pred_fallthru
      _
    // Predicated region
    $region10: #{tpu_custom_call.1} parent=1 // pred_check
      _
    $region11: #{tpu_custom_call.1} parent=1 // pred_check_branch
      %41 = sbr.rel (0) target = $region13
    $region12: #{tpu_custom_call.1} parent=1 // pred_region
      _
    $region13: #{tpu_custom_call.1} parent=1 // pred_fallthru
      _
    // Predicated region
    $region14: #{tpu_custom_call.1} parent=1 // pred_check
      _
    $region15: #{tpu_custom_call.1} parent=1 // pred_check_branch
      %43 = sbr.rel (0) target = $region17
    $region16: #{tpu_custom_call.1} parent=1 // pred_region
      _
    $region17: #{tpu_custom_call.1} parent=1 // pred_fallthru
      _
    // Predicated region
    $region18: #{tpu_custom_call.1} parent=1 // pred_check
      _
    $region19: #{tpu_custom_call.1} parent=1 // pred_check_branch
      %45 = sbr.rel (0) target = $region21
    $region20: #{tpu_custom_call.1} parent=1 // pred_region
      _
    $region21: #{tpu_custom_call.1} parent=1 // pred_fallthru
      _
    // Predicated region
    $region22: #{tpu_custom_call.1} parent=1 // pred_check
      _
    $region23: #{tpu_custom_call.1} parent=1 // pred_check_branch
      %47 = sbr.rel (0) target = $region25
    $region24: #{tpu_custom_call.1} parent=1 // pred_region
      %s49 = ssub.s32 16384, 16384
      %50 = vsyncadd [#allocation6], %s49
      %s51 = sshll.u32 [#allocation7], 4
      %s52 = int_to_ptr.vmem [resolvable:$true] %s51
      %57 = dma.hbm_to_vmem [thread:$0]  %s5, 16384, %s52, [#allocation6], 256, 256, 16
    $region25: #{tpu_custom_call.1} parent=1 // pred_fallthru
      _
    // Predicated region
    $region26: #{tpu_custom_call.1} parent=1 // pred_check
      _
    $region27: #{tpu_custom_call.1} parent=1 // pred_check_branch
      %59 = sbr.rel (0) target = $region29
    $region28: #{tpu_custom_call.1} parent=1 // pred_region
      _
    $region29: #{tpu_custom_call.1} parent=1 // pred_fallthru
      _
    // Predicated region
    $region30: #{tpu_custom_call.1} parent=1 // pred_check
      _
    $region31: #{tpu_custom_call.1} parent=1 // pred_check_branch
      %61 = sbr.rel (0) target = $region33
    $region32: #{tpu_custom_call.1} parent=1 // pred_region
      %s63 = ssub.s32 4096, 4096
      %64 = vsyncadd [#allocation9], %s63
      %s65 = sshll.u32 [#allocation8], 4
      %s66 = int_to_ptr.vmem [resolvable:$true] %s65
      %71 = dma.hbm_to_vmem [thread:$0]  %s7, 4096, %s66, [#allocation9], 64, 64, 4
    $region33: #{tpu_custom_call.1} parent=1 // pred_fallthru
      _
    // Predicated region
    $region34: #{tpu_custom_call.1} parent=1 // pred_check
      _
    $region35: #{tpu_custom_call.1} parent=1 // pred_check_branch
      %73 = sbr.rel (0) target = $region37
    $region36: #{tpu_custom_call.1} parent=1 // pred_region
      _
    $region37: #{tpu_custom_call.1} parent=1 // pred_fallthru
      _
    // Predicated region
    $region38: #{tpu_custom_call.1} parent=1 // pred_check
      _
    $region39: #{tpu_custom_call.1} parent=1 // pred_check_branch
      %75 = sbr.rel (0) target = $region41
    $region40: #{tpu_custom_call.1} parent=1 // pred_region
      %76 = dma.done [#allocation3], 128
    $region41: #{tpu_custom_call.1} parent=1 // pred_fallthru
      _
    // Predicated region
    $region42: #{tpu_custom_call.1} parent=1 // pred_check
      _
    $region43: #{tpu_custom_call.1} parent=1 // pred_check_branch
      %78 = sbr.rel (0) target = $region45
    $region44: #{tpu_custom_call.1} parent=1 // pred_region
      %79 = dma.done [#allocation6], 4096
    $region45: #{tpu_custom_call.1} parent=1 // pred_fallthru
      _
    // Predicated region
    $region46: #{tpu_custom_call.1} parent=1 // pred_check
      _
    $region47: #{tpu_custom_call.1} parent=1 // pred_check_branch
      %81 = sbr.rel (0) target = $region49
    $region48: #{tpu_custom_call.1} parent=1 // pred_region
      %82 = dma.done [#allocation6], 16384
    $region49: #{tpu_custom_call.1} parent=1 // pred_fallthru
      _
    // Predicated region
    $region50: #{tpu_custom_call.1} parent=1 // pred_check
      _
    $region51: #{tpu_custom_call.1} parent=1 // pred_check_branch
      %84 = sbr.rel (0) target = $region53
    $region52: #{tpu_custom_call.1} parent=1 // pred_region
      %85 = dma.done [#allocation9], 4096
    $region53: #{tpu_custom_call.1} parent=1 // pred_fallthru
      _
    %v87 = vld [vmem:[#allocation2] sm:$0xff]
    %v88 = vpack.c.bf16 %v87, %v87
    %v89 = vld [vmem:[#allocation5] sm:$0xff]
    %v90 = vld [vmem:[#allocation5 + $0x8] sm:$0xff]
    %v91 = vld [vmem:[#allocation5 + $0x10] sm:$0xff]
    %v92 = vld [vmem:[#allocation5 + $0x18] sm:$0xff]
    %v93 = vld [vmem:[#allocation5 + $0x20] sm:$0xff]
    %v94 = vld [vmem:[#allocation5 + $0x28] sm:$0xff]
    %v95 = vld [vmem:[#allocation5 + $0x30] sm:$0xff]
    %v96 = vld [vmem:[#allocation5 + $0x38] sm:$0xff]
    %v97 = vld [vmem:[#allocation5 + $0x40] sm:$0xff]
    %v98 = vld [vmem:[#allocation5 + $0x48] sm:$0xff]
    %v99 = vld [vmem:[#allocation5 + $0x50] sm:$0xff]
    %v100 = vld [vmem:[#allocation5 + $0x58] sm:$0xff]
    %v101 = vld [vmem:[#allocation5 + $0x60] sm:$0xff]
    %v102 = vld [vmem:[#allocation5 + $0x68] sm:$0xff]
    %v103 = vld [vmem:[#allocation5 + $0x70] sm:$0xff]
    %v104 = vld [vmem:[#allocation5 + $0x78] sm:$0xff]
    %v105 = vld [vmem:[#allocation5 + $0x80] sm:$0xff]
    %v106 = vld [vmem:[#allocation5 + $0x88] sm:$0xff]
    %v107 = vld [vmem:[#allocation5 + $0x90] sm:$0xff]
    %v108 = vld [vmem:[#allocation5 + $0x98] sm:$0xff]
    %v109 = vld [vmem:[#allocation5 + $0xa0] sm:$0xff]
    %v110 = vld [vmem:[#allocation5 + $0xa8] sm:$0xff]
    %v111 = vld [vmem:[#allocation5 + $0xb0] sm:$0xff]
    %v112 = vld [vmem:[#allocation5 + $0xb8] sm:$0xff]
    %v113 = vld [vmem:[#allocation5 + $0xc0] sm:$0xff]
    %v114 = vld [vmem:[#allocation5 + $0xc8] sm:$0xff]
    %v115 = vld [vmem:[#allocation5 + $0xd0] sm:$0xff]
    %v116 = vld [vmem:[#allocation5 + $0xd8] sm:$0xff]
    %v117 = vld [vmem:[#allocation5 + $0xe0] sm:$0xff]
    %v118 = vld [vmem:[#allocation5 + $0xe8] sm:$0xff]
    %v119 = vld [vmem:[#allocation5 + $0xf0] sm:$0xff]
    %v120 = vld [vmem:[#allocation5 + $0xf8] sm:$0xff]
    %v121 = vld [vmem:[%s2] sm:$0xf]
    %v123 = vlaneseq
    %v124 = vshrl.u32 %v123, 7
    %v125 = vsub.s32 0, %v124
    %v126 = vrot.slane %v121, %v125
    %v127 = vlaneseq
    %v128 = vshrl.u32 %v127, 7
    %v129 = vsub.s32 1, %v128
    %v130 = vrot.slane %v121, %v129
    %v131 = vlaneseq
    %v132 = vshrl.u32 %v131, 7
    %v133 = vsub.s32 2, %v132
    %v134 = vrot.slane %v121, %v133
    %v135 = vlaneseq
    %v136 = vshrl.u32 %v135, 7
    %v137 = vsub.s32 3, %v136
    %v138 = vrot.slane %v121, %v137
    %v175 = vunpack.c.l.b16 %v89
    %v176 = vunpack.c.h.b16 %v89
    %v177 = vunpack.c.l.b16 %v90
    %v178 = vunpack.c.h.b16 %v90
    %v179 = vunpack.c.l.b16 %v91
    %v180 = vunpack.c.h.b16 %v91
    %v181 = vunpack.c.l.b16 %v92
    %v182 = vunpack.c.h.b16 %v92
    %v183 = vunpack.c.l.b16 %v93
    %v184 = vunpack.c.h.b16 %v93
    %v185 = vunpack.c.l.b16 %v94
    %v186 = vunpack.c.h.b16 %v94
    %v187 = vunpack.c.l.b16 %v95
    %v188 = vunpack.c.h.b16 %v95
    %v189 = vunpack.c.l.b16 %v96
    %v190 = vunpack.c.h.b16 %v96
    %v191 = vunpack.c.l.b16 %v97
    %v192 = vunpack.c.h.b16 %v97
    %v193 = vunpack.c.l.b16 %v98
    %v194 = vunpack.c.h.b16 %v98
    %v195 = vunpack.c.l.b16 %v99
    %v196 = vunpack.c.h.b16 %v99
    %v197 = vunpack.c.l.b16 %v100
    %v198 = vunpack.c.h.b16 %v100
    %v199 = vunpack.c.l.b16 %v101
    %v200 = vunpack.c.h.b16 %v101
    %v201 = vunpack.c.l.b16 %v102
    %v202 = vunpack.c.h.b16 %v102
    %v203 = vunpack.c.l.b16 %v103
    %v204 = vunpack.c.h.b16 %v103
    %v205 = vunpack.c.l.b16 %v104
    %v206 = vunpack.c.h.b16 %v104
    %v207 = vunpack.c.l.b16 %v105
    %v208 = vunpack.c.h.b16 %v105
    %v209 = vunpack.c.l.b16 %v106
    %v210 = vunpack.c.h.b16 %v106
    %v211 = vunpack.c.l.b16 %v107
    %v212 = vunpack.c.h.b16 %v107
    %v213 = vunpack.c.l.b16 %v108
    %v214 = vunpack.c.h.b16 %v108
    %v215 = vunpack.c.l.b16 %v109
    %v216 = vunpack.c.h.b16 %v109
    %v217 = vunpack.c.l.b16 %v110
    %v218 = vunpack.c.h.b16 %v110
    %v219 = vunpack.c.l.b16 %v111
    %v220 = vunpack.c.h.b16 %v111
    %v221 = vunpack.c.l.b16 %v112
    %v222 = vunpack.c.h.b16 %v112
    %v223 = vunpack.c.l.b16 %v113
    %v224 = vunpack.c.h.b16 %v113
    %v225 = vunpack.c.l.b16 %v114
    %v226 = vunpack.c.h.b16 %v114
    %v227 = vunpack.c.l.b16 %v115
    %v228 = vunpack.c.h.b16 %v115
    %v229 = vunpack.c.l.b16 %v116
    %v230 = vunpack.c.h.b16 %v116
    %v231 = vunpack.c.l.b16 %v117
    %v232 = vunpack.c.h.b16 %v117
    %v233 = vunpack.c.l.b16 %v118
    %v234 = vunpack.c.h.b16 %v118
    %v235 = vunpack.c.l.b16 %v119
    %v236 = vunpack.c.h.b16 %v119
    %v237 = vunpack.c.l.b16 %v120
    %v238 = vunpack.c.h.b16 %v120
    %v239 = vpack.c.b16 %v179, %v175
    %v240 = vpack.c.b16 %v180, %v176
    %v241 = vpack.c.b16 %v181, %v177
    %v242 = vpack.c.b16 %v182, %v178
    %v243 = vpack.c.b16 %v187, %v183
    %v244 = vpack.c.b16 %v188, %v184
    %v245 = vpack.c.b16 %v189, %v185
    %v246 = vpack.c.b16 %v190, %v186
    %v247 = vpack.c.b16 %v195, %v191
    %v248 = vpack.c.b16 %v196, %v192
    %v249 = vpack.c.b16 %v197, %v193
    %v250 = vpack.c.b16 %v198, %v194
    %v251 = vpack.c.b16 %v203, %v199
    %v252 = vpack.c.b16 %v204, %v200
    %v253 = vpack.c.b16 %v205, %v201
    %v254 = vpack.c.b16 %v206, %v202
    %v255 = vpack.c.b16 %v211, %v207
    %v256 = vpack.c.b16 %v212, %v208
    %v257 = vpack.c.b16 %v213, %v209
    %v258 = vpack.c.b16 %v214, %v210
    %v259 = vpack.c.b16 %v219, %v215
    %v260 = vpack.c.b16 %v220, %v216
    %v261 = vpack.c.b16 %v221, %v217
    %v262 = vpack.c.b16 %v222, %v218
    %v263 = vpack.c.b16 %v227, %v223
    %v264 = vpack.c.b16 %v228, %v224
    %v265 = vpack.c.b16 %v229, %v225
    %v266 = vpack.c.b16 %v230, %v226
    %v267 = vpack.c.b16 %v235, %v231
    %v268 = vpack.c.b16 %v236, %v232
    %v269 = vpack.c.b16 %v237, %v233
    %v270 = vpack.c.b16 %v238, %v234
    %303 = vmatprep.subr.bf16.mxu0 %v240
    %304 = vmatpush1.bf16.msra.mxu0 %v239
    %305 = vmatprep.subr.bf16.mxu0 %v244
    %306 = vmatpush1.bf16.msra.mxu0 %v243
    %307 = vmatprep.subr.bf16.mxu0 %v248
    %308 = vmatpush1.bf16.msra.mxu0 %v247
    %309 = vmatprep.subr.bf16.mxu0 %v252
    %310 = vmatpush1.bf16.msra.mxu0 %v251
    %311 = vmatprep.subr.bf16.mxu0 %v256
    %312 = vmatpush1.bf16.msra.mxu0 %v255
    %313 = vmatprep.subr.bf16.mxu0 %v260
    %314 = vmatpush1.bf16.msra.mxu0 %v259
    %315 = vmatprep.subr.bf16.mxu0 %v264
    %316 = vmatpush1.bf16.msra.mxu0 %v263
    %317 = vmatprep.subr.bf16.mxu0 %v268
    %318 = vmatpush1.bf16.msra.mxu0 %v267
    %319 = vmatprep.subr.bf16.mxu0 0
    %320 = vmatpush1.bf16.msra.mxu0 0
    %321 = vmatprep.subr.bf16.mxu0 0
    %322 = vmatpush1.bf16.msra.mxu0 0
    %323 = vmatprep.subr.bf16.mxu0 0
    %324 = vmatpush1.bf16.msra.mxu0 0
    %325 = vmatprep.subr.bf16.mxu0 0
    %326 = vmatpush1.bf16.msra.mxu0 0
    %327 = vmatprep.subr.bf16.mxu0 0
    %328 = vmatpush1.bf16.msra.mxu0 0
    %329 = vmatprep.subr.bf16.mxu0 0
    %330 = vmatpush1.bf16.msra.mxu0 0
    %331 = vmatprep.subr.bf16.mxu0 0
    %332 = vmatpush1.bf16.msra.mxu0 0
    %333 = vmatprep.subr.bf16.mxu0 0
    %334 = vmatpush1.bf16.msra.mxu0 0
    %335 = vmatprep.mubr.bf16.mxu0 0
    %336 = vmatmul.mubr.bf16.gmra.mrb[0].mxu0 %v88
    %v337 = vpop.f32.mrb[0].mxu0
    %v338 = vadd.f32 %v126, %v337
    %v339 = vpop.f32.mrb[0].mxu0
    %v340 = vadd.f32 %v130, %v339
    %v341 = vpop.f32.mrb[0].mxu0
    %v342 = vpop.f32.mrb[0].mxu0
    %343 = vdwg.mxu0
    %344 = vmatprep.subr.bf16.mxu0 %v242
    %345 = vmatpush1.bf16.msra.mxu0 %v241
    %346 = vmatprep.subr.bf16.mxu0 %v246
    %347 = vmatpush1.bf16.msra.mxu0 %v245
    %348 = vmatprep.subr.bf16.mxu0 %v250
    %349 = vmatpush1.bf16.msra.mxu0 %v249
    %350 = vmatprep.subr.bf16.mxu0 %v254
    %351 = vmatpush1.bf16.msra.mxu0 %v253
    %352 = vmatprep.subr.bf16.mxu0 %v258
    %353 = vmatpush1.bf16.msra.mxu0 %v257
    %354 = vmatprep.subr.bf16.mxu0 %v262
    %355 = vmatpush1.bf16.msra.mxu0 %v261
    %356 = vmatprep.subr.bf16.mxu0 %v266
    %357 = vmatpush1.bf16.msra.mxu0 %v265
    %358 = vmatprep.subr.bf16.mxu0 %v270
    %359 = vmatpush1.bf16.msra.mxu0 %v269
    %360 = vmatprep.subr.bf16.mxu0 0
    %361 = vmatpush1.bf16.msra.mxu0 0
    %362 = vmatprep.subr.bf16.mxu0 0
    %363 = vmatpush1.bf16.msra.mxu0 0
    %364 = vmatprep.subr.bf16.mxu0 0
    %365 = vmatpush1.bf16.msra.mxu0 0
    %366 = vmatprep.subr.bf16.mxu0 0
    %367 = vmatpush1.bf16.msra.mxu0 0
    %368 = vmatprep.subr.bf16.mxu0 0
    %369 = vmatpush1.bf16.msra.mxu0 0
    %370 = vmatprep.subr.bf16.mxu0 0
    %371 = vmatpush1.bf16.msra.mxu0 0
    %372 = vmatprep.subr.bf16.mxu0 0
    %373 = vmatpush1.bf16.msra.mxu0 0
    %374 = vmatprep.subr.bf16.mxu0 0
    %375 = vmatpush1.bf16.msra.mxu0 0
    %376 = vmatprep.mubr.bf16.mxu0 0
    %377 = vmatmul.mubr.bf16.gmra.mrb[0].mxu0 %v88
    %v378 = vpop.f32.mrb[0].mxu0
    %v379 = vadd.f32 %v134, %v378
    %v380 = vpop.f32.mrb[0].mxu0
    %v381 = vadd.f32 %v138, %v380
    %v382 = vpop.f32.mrb[0].mxu0
    %v383 = vpop.f32.mrb[0].mxu0
    %384 = vdwg.mxu0
    %v385 = vadd.f32 %v338, %v340
    %v386 = vadd.f32 %v385, %v379
    %v387 = vadd.f32 %v386, %v381
    %388 = vadd.xlane.f32.xlu0 %v387
    %v389 = vpop.xlane.xlu0 %388
    %v390 = vmul.f32 %v338, %v338
    %v391 = vmul.f32 %v340, %v340
    %v392 = vmul.f32 %v379, %v379
    %v393 = vmul.f32 %v381, %v381
    %v394 = vadd.f32 %v390, %v391
    %v395 = vadd.f32 %v394, %v392
    %v396 = vadd.f32 %v395, %v393
    %397 = vadd.xlane.f32.xlu0 %v396
    %v398 = vpop.xlane.xlu0 %397
    %v399 = vmul.f32 %v389, 0.001953125
    %v400 = vmul.f32 %v398, 0.001953125
    %v401 = vmul.f32 %v399, %v399
    %v402 = vsub.f32 %v400, %v401
    %v403 = vmax.f32 %v402, 0.0
    %v404 = vsub.f32 %v338, %v399
    %v405 = vsub.f32 %v340, %v399
    %v406 = vsub.f32 %v379, %v399
    %v407 = vsub.f32 %v381, %v399
    %v408 = vadd.f32 %v403, 1e-05
    %v409 = vrsqrt.pop %v408
    %v410 = vmul.f32 %v404, %v409
    %v411 = vmul.f32 %v405, %v409
    %v412 = vmul.f32 %v406, %v409
    %v413 = vmul.f32 %v407, %v409
    %v414 = vld [vmem:[%s3] sm:$0xf]
    %v416 = vlaneseq
    %v417 = vshrl.u32 %v416, 7
    %v418 = vsub.s32 0, %v417
    %v419 = vrot.slane %v414, %v418
    %v420 = vlaneseq
    %v421 = vshrl.u32 %v420, 7
    %v422 = vsub.s32 1, %v421
    %v423 = vrot.slane %v414, %v422
    %v424 = vlaneseq
    %v425 = vshrl.u32 %v424, 7
    %v426 = vsub.s32 2, %v425
    %v427 = vrot.slane %v414, %v426
    %v428 = vlaneseq
    %v429 = vshrl.u32 %v428, 7
    %v430 = vsub.s32 3, %v429
    %v431 = vrot.slane %v414, %v430
    %v436 = vmul.f32 %v410, %v419
    %v437 = vmul.f32 %v411, %v423
    %v438 = vmul.f32 %v412, %v427
    %v439 = vmul.f32 %v413, %v431
    %v440 = vld [vmem:[%s4] sm:$0xf]
    %v442 = vlaneseq
    %v443 = vshrl.u32 %v442, 7
    %v444 = vsub.s32 0, %v443
    %v445 = vrot.slane %v440, %v444
    %v446 = vlaneseq
    %v447 = vshrl.u32 %v446, 7
    %v448 = vsub.s32 1, %v447
    %v449 = vrot.slane %v440, %v448
    %v450 = vlaneseq
    %v451 = vshrl.u32 %v450, 7
    %v452 = vsub.s32 2, %v451
    %v453 = vrot.slane %v440, %v452
    %v454 = vlaneseq
    %v455 = vshrl.u32 %v454, 7
    %v456 = vsub.s32 3, %v455
    %v457 = vrot.slane %v440, %v456
    %v462 = vadd.f32 %v436, %v445
    %v463 = vadd.f32 %v437, %v449
    %v464 = vadd.f32 %v438, %v453
    %v465 = vadd.f32 %v439, %v457
    %v466 = vmax.f32 %v462, 0.0
    %v467 = vmax.f32 %v463, 0.0
    %v468 = vmax.f32 %v464, 0.0
    %v469 = vmax.f32 %v465, 0.0
    %v470 = vpack.c.bf16 %v466, %v466
    %v471 = vpack.c.bf16 %v467, %v467
    %v472 = vpack.c.bf16 %v468, %v468
    %v473 = vpack.c.bf16 %v469, %v469
    %v474 = vld [vmem:[#allocation7] sm:$0xff]
    %v475 = vld [vmem:[#allocation7 + $0x8] sm:$0xff]
    %v476 = vld [vmem:[#allocation7 + $0x10] sm:$0xff]
    %v477 = vld [vmem:[#allocation7 + $0x18] sm:$0xff]
    %v478 = vld [vmem:[#allocation7 + $0x20] sm:$0xff]
    %v479 = vld [vmem:[#allocation7 + $0x28] sm:$0xff]
    %v480 = vld [vmem:[#allocation7 + $0x30] sm:$0xff]
    %v481 = vld [vmem:[#allocation7 + $0x38] sm:$0xff]
    %v482 = vld [vmem:[#allocation7 + $0x40] sm:$0xff]
    %v483 = vld [vmem:[#allocation7 + $0x48] sm:$0xff]
    %v484 = vld [vmem:[#allocation7 + $0x50] sm:$0xff]
    %v485 = vld [vmem:[#allocation7 + $0x58] sm:$0xff]
    %v486 = vld [vmem:[#allocation7 + $0x60] sm:$0xff]
    %v487 = vld [vmem:[#allocation7 + $0x68] sm:$0xff]
    %v488 = vld [vmem:[#allocation7 + $0x70] sm:$0xff]
    %v489 = vld [vmem:[#allocation7 + $0x78] sm:$0xff]
    %v490 = vld [vmem:[#allocation7 + $0x80] sm:$0xff]
    %v491 = vld [vmem:[#allocation7 + $0x88] sm:$0xff]
    %v492 = vld [vmem:[#allocation7 + $0x90] sm:$0xff]
    %v493 = vld [vmem:[#allocation7 + $0x98] sm:$0xff]
    %v494 = vld [vmem:[#allocation7 + $0xa0] sm:$0xff]
    %v495 = vld [vmem:[#allocation7 + $0xa8] sm:$0xff]
    %v496 = vld [vmem:[#allocation7 + $0xb0] sm:$0xff]
    %v497 = vld [vmem:[#allocation7 + $0xb8] sm:$0xff]
    %v498 = vld [vmem:[#allocation7 + $0xc0] sm:$0xff]
    %v499 = vld [vmem:[#allocation7 + $0xc8] sm:$0xff]
    %v500 = vld [vmem:[#allocation7 + $0xd0] sm:$0xff]
    %v501 = vld [vmem:[#allocation7 + $0xd8] sm:$0xff]
    %v502 = vld [vmem:[#allocation7 + $0xe0] sm:$0xff]
    %v503 = vld [vmem:[#allocation7 + $0xe8] sm:$0xff]
    %v504 = vld [vmem:[#allocation7 + $0xf0] sm:$0xff]
    %v505 = vld [vmem:[#allocation7 + $0xf8] sm:$0xff]
    %v506 = vld [vmem:[#allocation7 + $0x100] sm:$0xff]
    %v507 = vld [vmem:[#allocation7 + $0x108] sm:$0xff]
    %v508 = vld [vmem:[#allocation7 + $0x110] sm:$0xff]
    %v509 = vld [vmem:[#allocation7 + $0x118] sm:$0xff]
    %v510 = vld [vmem:[#allocation7 + $0x120] sm:$0xff]
    %v511 = vld [vmem:[#allocation7 + $0x128] sm:$0xff]
    %v512 = vld [vmem:[#allocation7 + $0x130] sm:$0xff]
    %v513 = vld [vmem:[#allocation7 + $0x138] sm:$0xff]
    %v514 = vld [vmem:[#allocation7 + $0x140] sm:$0xff]
    %v515 = vld [vmem:[#allocation7 + $0x148] sm:$0xff]
    %v516 = vld [vmem:[#allocation7 + $0x150] sm:$0xff]
    %v517 = vld [vmem:[#allocation7 + $0x158] sm:$0xff]
    %v518 = vld [vmem:[#allocation7 + $0x160] sm:$0xff]
    %v519 = vld [vmem:[#allocation7 + $0x168] sm:$0xff]
    %v520 = vld [vmem:[#allocation7 + $0x170] sm:$0xff]
    %v521 = vld [vmem:[#allocation7 + $0x178] sm:$0xff]
    %v522 = vld [vmem:[#allocation7 + $0x180] sm:$0xff]
    %v523 = vld [vmem:[#allocation7 + $0x188] sm:$0xff]
    %v524 = vld [vmem:[#allocation7 + $0x190] sm:$0xff]
    %v525 = vld [vmem:[#allocation7 + $0x198] sm:$0xff]
    %v526 = vld [vmem:[#allocation7 + $0x1a0] sm:$0xff]
    %v527 = vld [vmem:[#allocation7 + $0x1a8] sm:$0xff]
    %v528 = vld [vmem:[#allocation7 + $0x1b0] sm:$0xff]
    %v529 = vld [vmem:[#allocation7 + $0x1b8] sm:$0xff]
    %v530 = vld [vmem:[#allocation7 + $0x1c0] sm:$0xff]
    %v531 = vld [vmem:[#allocation7 + $0x1c8] sm:$0xff]
    %v532 = vld [vmem:[#allocation7 + $0x1d0] sm:$0xff]
    %v533 = vld [vmem:[#allocation7 + $0x1d8] sm:$0xff]
    %v534 = vld [vmem:[#allocation7 + $0x1e0] sm:$0xff]
    %v535 = vld [vmem:[#allocation7 + $0x1e8] sm:$0xff]
    %v536 = vld [vmem:[#allocation7 + $0x1f0] sm:$0xff]
    %v537 = vld [vmem:[#allocation7 + $0x1f8] sm:$0xff]
    %v538 = vld [vmem:[#allocation7 + $0x200] sm:$0xff]
    %v539 = vld [vmem:[#allocation7 + $0x208] sm:$0xff]
    %v540 = vld [vmem:[#allocation7 + $0x210] sm:$0xff]
    %v541 = vld [vmem:[#allocation7 + $0x218] sm:$0xff]
    %v542 = vld [vmem:[#allocation7 + $0x220] sm:$0xff]
    %v543 = vld [vmem:[#allocation7 + $0x228] sm:$0xff]
    %v544 = vld [vmem:[#allocation7 + $0x230] sm:$0xff]
    %v545 = vld [vmem:[#allocation7 + $0x238] sm:$0xff]
    %v546 = vld [vmem:[#allocation7 + $0x240] sm:$0xff]
    %v547 = vld [vmem:[#allocation7 + $0x248] sm:$0xff]
    %v548 = vld [vmem:[#allocation7 + $0x250] sm:$0xff]
    %v549 = vld [vmem:[#allocation7 + $0x258] sm:$0xff]
    %v550 = vld [vmem:[#allocation7 + $0x260] sm:$0xff]
    %v551 = vld [vmem:[#allocation7 + $0x268] sm:$0xff]
    %v552 = vld [vmem:[#allocation7 + $0x270] sm:$0xff]
    %v553 = vld [vmem:[#allocation7 + $0x278] sm:$0xff]
    %v554 = vld [vmem:[#allocation7 + $0x280] sm:$0xff]
    %v555 = vld [vmem:[#allocation7 + $0x288] sm:$0xff]
    %v556 = vld [vmem:[#allocation7 + $0x290] sm:$0xff]
    %v557 = vld [vmem:[#allocation7 + $0x298] sm:$0xff]
    %v558 = vld [vmem:[#allocation7 + $0x2a0] sm:$0xff]
    %v559 = vld [vmem:[#allocation7 + $0x2a8] sm:$0xff]
    %v560 = vld [vmem:[#allocation7 + $0x2b0] sm:$0xff]
    %v561 = vld [vmem:[#allocation7 + $0x2b8] sm:$0xff]
    %v562 = vld [vmem:[#allocation7 + $0x2c0] sm:$0xff]
    %v563 = vld [vmem:[#allocation7 + $0x2c8] sm:$0xff]
    %v564 = vld [vmem:[#allocation7 + $0x2d0] sm:$0xff]
    %v565 = vld [vmem:[#allocation7 + $0x2d8] sm:$0xff]
    %v566 = vld [vmem:[#allocation7 + $0x2e0] sm:$0xff]
    %v567 = vld [vmem:[#allocation7 + $0x2e8] sm:$0xff]
    %v568 = vld [vmem:[#allocation7 + $0x2f0] sm:$0xff]
    %v569 = vld [vmem:[#allocation7 + $0x2f8] sm:$0xff]
    %v570 = vld [vmem:[#allocation7 + $0x300] sm:$0xff]
    %v571 = vld [vmem:[#allocation7 + $0x308] sm:$0xff]
    %v572 = vld [vmem:[#allocation7 + $0x310] sm:$0xff]
    %v573 = vld [vmem:[#allocation7 + $0x318] sm:$0xff]
    %v574 = vld [vmem:[#allocation7 + $0x320] sm:$0xff]
    %v575 = vld [vmem:[#allocation7 + $0x328] sm:$0xff]
    %v576 = vld [vmem:[#allocation7 + $0x330] sm:$0xff]
    %v577 = vld [vmem:[#allocation7 + $0x338] sm:$0xff]
    %v578 = vld [vmem:[#allocation7 + $0x340] sm:$0xff]
    %v579 = vld [vmem:[#allocation7 + $0x348] sm:$0xff]
    %v580 = vld [vmem:[#allocation7 + $0x350] sm:$0xff]
    %v581 = vld [vmem:[#allocation7 + $0x358] sm:$0xff]
    %v582 = vld [vmem:[#allocation7 + $0x360] sm:$0xff]
    %v583 = vld [vmem:[#allocation7 + $0x368] sm:$0xff]
    %v584 = vld [vmem:[#allocation7 + $0x370] sm:$0xff]
    %v585 = vld [vmem:[#allocation7 + $0x378] sm:$0xff]
    %v586 = vld [vmem:[#allocation7 + $0x380] sm:$0xff]
    %v587 = vld [vmem:[#allocation7 + $0x388] sm:$0xff]
    %v588 = vld [vmem:[#allocation7 + $0x390] sm:$0xff]
    %v589 = vld [vmem:[#allocation7 + $0x398] sm:$0xff]
    %v590 = vld [vmem:[#allocation7 + $0x3a0] sm:$0xff]
    %v591 = vld [vmem:[#allocation7 + $0x3a8] sm:$0xff]
    %v592 = vld [vmem:[#allocation7 + $0x3b0] sm:$0xff]
    %v593 = vld [vmem:[#allocation7 + $0x3b8] sm:$0xff]
    %v594 = vld [vmem:[#allocation7 + $0x3c0] sm:$0xff]
    %v595 = vld [vmem:[#allocation7 + $0x3c8] sm:$0xff]
    %v596 = vld [vmem:[#allocation7 + $0x3d0] sm:$0xff]
    %v597 = vld [vmem:[#allocation7 + $0x3d8] sm:$0xff]
    %v598 = vld [vmem:[#allocation7 + $0x3e0] sm:$0xff]
    %v599 = vld [vmem:[#allocation7 + $0x3e8] sm:$0xff]
    %v600 = vld [vmem:[#allocation7 + $0x3f0] sm:$0xff]
    %v601 = vld [vmem:[#allocation7 + $0x3f8] sm:$0xff]
    %v602 = vld [vmem:[%s6] sm:$0xf]
    %v604 = vlaneseq
    %v605 = vshrl.u32 %v604, 7
    %v606 = vsub.s32 0, %v605
    %v607 = vrot.slane %v602, %v606
    %v608 = vlaneseq
    %v609 = vshrl.u32 %v608, 7
    %v610 = vsub.s32 1, %v609
    %v611 = vrot.slane %v602, %v610
    %v612 = vlaneseq
    %v613 = vshrl.u32 %v612, 7
    %v614 = vsub.s32 2, %v613
    %v615 = vrot.slane %v602, %v614
    %v616 = vlaneseq
    %v617 = vshrl.u32 %v616, 7
    %v618 = vsub.s32 3, %v617
    %v619 = vrot.slane %v602, %v618
    %v752 = vunpack.c.l.b16 %v474
    %v753 = vunpack.c.h.b16 %v474
    %v754 = vunpack.c.l.b16 %v475
    %v755 = vunpack.c.h.b16 %v475
    %v756 = vunpack.c.l.b16 %v476
    %v757 = vunpack.c.h.b16 %v476
    %v758 = vunpack.c.l.b16 %v477
    %v759 = vunpack.c.h.b16 %v477
    %v760 = vunpack.c.l.b16 %v478
    %v761 = vunpack.c.h.b16 %v478
    %v762 = vunpack.c.l.b16 %v479
    %v763 = vunpack.c.h.b16 %v479
    %v764 = vunpack.c.l.b16 %v480
    %v765 = vunpack.c.h.b16 %v480
    %v766 = vunpack.c.l.b16 %v481
    %v767 = vunpack.c.h.b16 %v481
    %v768 = vunpack.c.l.b16 %v482
    %v769 = vunpack.c.h.b16 %v482
    %v770 = vunpack.c.l.b16 %v483
    %v771 = vunpack.c.h.b16 %v483
    %v772 = vunpack.c.l.b16 %v484
    %v773 = vunpack.c.h.b16 %v484
    %v774 = vunpack.c.l.b16 %v485
    %v775 = vunpack.c.h.b16 %v485
    %v776 = vunpack.c.l.b16 %v486
    %v777 = vunpack.c.h.b16 %v486
    %v778 = vunpack.c.l.b16 %v487
    %v779 = vunpack.c.h.b16 %v487
    %v780 = vunpack.c.l.b16 %v488
    %v781 = vunpack.c.h.b16 %v488
    %v782 = vunpack.c.l.b16 %v489
    %v783 = vunpack.c.h.b16 %v489
    %v784 = vunpack.c.l.b16 %v490
    %v785 = vunpack.c.h.b16 %v490
    %v786 = vunpack.c.l.b16 %v491
    %v787 = vunpack.c.h.b16 %v491
    %v788 = vunpack.c.l.b16 %v492
    %v789 = vunpack.c.h.b16 %v492
    %v790 = vunpack.c.l.b16 %v493
    %v791 = vunpack.c.h.b16 %v493
    %v792 = vunpack.c.l.b16 %v494
    %v793 = vunpack.c.h.b16 %v494
    %v794 = vunpack.c.l.b16 %v495
    %v795 = vunpack.c.h.b16 %v495
    %v796 = vunpack.c.l.b16 %v496
    %v797 = vunpack.c.h.b16 %v496
    %v798 = vunpack.c.l.b16 %v497
    %v799 = vunpack.c.h.b16 %v497
    %v800 = vunpack.c.l.b16 %v498
    %v801 = vunpack.c.h.b16 %v498
    %v802 = vunpack.c.l.b16 %v499
    %v803 = vunpack.c.h.b16 %v499
    %v804 = vunpack.c.l.b16 %v500
    %v805 = vunpack.c.h.b16 %v500
    %v806 = vunpack.c.l.b16 %v501
    %v807 = vunpack.c.h.b16 %v501
    %v808 = vunpack.c.l.b16 %v502
    %v809 = vunpack.c.h.b16 %v502
    %v810 = vunpack.c.l.b16 %v503
    %v811 = vunpack.c.h.b16 %v503
    %v812 = vunpack.c.l.b16 %v504
    %v813 = vunpack.c.h.b16 %v504
    %v814 = vunpack.c.l.b16 %v505
    %v815 = vunpack.c.h.b16 %v505
    %v816 = vunpack.c.l.b16 %v506
    %v817 = vunpack.c.h.b16 %v506
    %v818 = vunpack.c.l.b16 %v507
    %v819 = vunpack.c.h.b16 %v507
    %v820 = vunpack.c.l.b16 %v508
    %v821 = vunpack.c.h.b16 %v508
    %v822 = vunpack.c.l.b16 %v509
    %v823 = vunpack.c.h.b16 %v509
    %v824 = vunpack.c.l.b16 %v510
    %v825 = vunpack.c.h.b16 %v510
    %v826 = vunpack.c.l.b16 %v511
    %v827 = vunpack.c.h.b16 %v511
    %v828 = vunpack.c.l.b16 %v512
    %v829 = vunpack.c.h.b16 %v512
    %v830 = vunpack.c.l.b16 %v513
    %v831 = vunpack.c.h.b16 %v513
    %v832 = vunpack.c.l.b16 %v514
    %v833 = vunpack.c.h.b16 %v514
    %v834 = vunpack.c.l.b16 %v515
    %v835 = vunpack.c.h.b16 %v515
    %v836 = vunpack.c.l.b16 %v516
    %v837 = vunpack.c.h.b16 %v516
    %v838 = vunpack.c.l.b16 %v517
    %v839 = vunpack.c.h.b16 %v517
    %v840 = vunpack.c.l.b16 %v518
    %v841 = vunpack.c.h.b16 %v518
    %v842 = vunpack.c.l.b16 %v519
    %v843 = vunpack.c.h.b16 %v519
    %v844 = vunpack.c.l.b16 %v520
    %v845 = vunpack.c.h.b16 %v520
    %v846 = vunpack.c.l.b16 %v521
    %v847 = vunpack.c.h.b16 %v521
    %v848 = vunpack.c.l.b16 %v522
    %v849 = vunpack.c.h.b16 %v522
    %v850 = vunpack.c.l.b16 %v523
    %v851 = vunpack.c.h.b16 %v523
    %v852 = vunpack.c.l.b16 %v524
    %v853 = vunpack.c.h.b16 %v524
    %v854 = vunpack.c.l.b16 %v525
    %v855 = vunpack.c.h.b16 %v525
    %v856 = vunpack.c.l.b16 %v526
    %v857 = vunpack.c.h.b16 %v526
    %v858 = vunpack.c.l.b16 %v527
    %v859 = vunpack.c.h.b16 %v527
    %v860 = vunpack.c.l.b16 %v528
    %v861 = vunpack.c.h.b16 %v528
    %v862 = vunpack.c.l.b16 %v529
    %v863 = vunpack.c.h.b16 %v529
    %v864 = vunpack.c.l.b16 %v530
    %v865 = vunpack.c.h.b16 %v530
    %v866 = vunpack.c.l.b16 %v531
    %v867 = vunpack.c.h.b16 %v531
    %v868 = vunpack.c.l.b16 %v532
    %v869 = vunpack.c.h.b16 %v532
    %v870 = vunpack.c.l.b16 %v533
    %v871 = vunpack.c.h.b16 %v533
    %v872 = vunpack.c.l.b16 %v534
    %v873 = vunpack.c.h.b16 %v534
    %v874 = vunpack.c.l.b16 %v535
    %v875 = vunpack.c.h.b16 %v535
    %v876 = vunpack.c.l.b16 %v536
    %v877 = vunpack.c.h.b16 %v536
    %v878 = vunpack.c.l.b16 %v537
    %v879 = vunpack.c.h.b16 %v537
    %v880 = vunpack.c.l.b16 %v538
    %v881 = vunpack.c.h.b16 %v538
    %v882 = vunpack.c.l.b16 %v539
    %v883 = vunpack.c.h.b16 %v539
    %v884 = vunpack.c.l.b16 %v540
    %v885 = vunpack.c.h.b16 %v540
    %v886 = vunpack.c.l.b16 %v541
    %v887 = vunpack.c.h.b16 %v541
    %v888 = vunpack.c.l.b16 %v542
    %v889 = vunpack.c.h.b16 %v542
    %v890 = vunpack.c.l.b16 %v543
    %v891 = vunpack.c.h.b16 %v543
    %v892 = vunpack.c.l.b16 %v544
    %v893 = vunpack.c.h.b16 %v544
    %v894 = vunpack.c.l.b16 %v545
    %v895 = vunpack.c.h.b16 %v545
    %v896 = vunpack.c.l.b16 %v546
    %v897 = vunpack.c.h.b16 %v546
    %v898 = vunpack.c.l.b16 %v547
    %v899 = vunpack.c.h.b16 %v547
    %v900 = vunpack.c.l.b16 %v548
    %v901 = vunpack.c.h.b16 %v548
    %v902 = vunpack.c.l.b16 %v549
    %v903 = vunpack.c.h.b16 %v549
    %v904 = vunpack.c.l.b16 %v550
    %v905 = vunpack.c.h.b16 %v550
    %v906 = vunpack.c.l.b16 %v551
    %v907 = vunpack.c.h.b16 %v551
    %v908 = vunpack.c.l.b16 %v552
    %v909 = vunpack.c.h.b16 %v552
    %v910 = vunpack.c.l.b16 %v553
    %v911 = vunpack.c.h.b16 %v553
    %v912 = vunpack.c.l.b16 %v554
    %v913 = vunpack.c.h.b16 %v554
    %v914 = vunpack.c.l.b16 %v555
    %v915 = vunpack.c.h.b16 %v555
    %v916 = vunpack.c.l.b16 %v556
    %v917 = vunpack.c.h.b16 %v556
    %v918 = vunpack.c.l.b16 %v557
    %v919 = vunpack.c.h.b16 %v557
    %v920 = vunpack.c.l.b16 %v558
    %v921 = vunpack.c.h.b16 %v558
    %v922 = vunpack.c.l.b16 %v559
    %v923 = vunpack.c.h.b16 %v559
    %v924 = vunpack.c.l.b16 %v560
    %v925 = vunpack.c.h.b16 %v560
    %v926 = vunpack.c.l.b16 %v561
    %v927 = vunpack.c.h.b16 %v561
    %v928 = vunpack.c.l.b16 %v562
    %v929 = vunpack.c.h.b16 %v562
    %v930 = vunpack.c.l.b16 %v563
    %v931 = vunpack.c.h.b16 %v563
    %v932 = vunpack.c.l.b16 %v564
    %v933 = vunpack.c.h.b16 %v564
    %v934 = vunpack.c.l.b16 %v565
    %v935 = vunpack.c.h.b16 %v565
    %v936 = vunpack.c.l.b16 %v566
    %v937 = vunpack.c.h.b16 %v566
    %v938 = vunpack.c.l.b16 %v567
    %v939 = vunpack.c.h.b16 %v567
    %v940 = vunpack.c.l.b16 %v568
    %v941 = vunpack.c.h.b16 %v568
    %v942 = vunpack.c.l.b16 %v569
    %v943 = vunpack.c.h.b16 %v569
    %v944 = vunpack.c.l.b16 %v570
    %v945 = vunpack.c.h.b16 %v570
    %v946 = vunpack.c.l.b16 %v571
    %v947 = vunpack.c.h.b16 %v571
    %v948 = vunpack.c.l.b16 %v572
    %v949 = vunpack.c.h.b16 %v572
    %v950 = vunpack.c.l.b16 %v573
    %v951 = vunpack.c.h.b16 %v573
    %v952 = vunpack.c.l.b16 %v574
    %v953 = vunpack.c.h.b16 %v574
    %v954 = vunpack.c.l.b16 %v575
    %v955 = vunpack.c.h.b16 %v575
    %v956 = vunpack.c.l.b16 %v576
    %v957 = vunpack.c.h.b16 %v576
    %v958 = vunpack.c.l.b16 %v577
    %v959 = vunpack.c.h.b16 %v577
    %v960 = vunpack.c.l.b16 %v578
    %v961 = vunpack.c.h.b16 %v578
    %v962 = vunpack.c.l.b16 %v579
    %v963 = vunpack.c.h.b16 %v579
    %v964 = vunpack.c.l.b16 %v580
    %v965 = vunpack.c.h.b16 %v580
    %v966 = vunpack.c.l.b16 %v581
    %v967 = vunpack.c.h.b16 %v581
    %v968 = vunpack.c.l.b16 %v582
    %v969 = vunpack.c.h.b16 %v582
    %v970 = vunpack.c.l.b16 %v583
    %v971 = vunpack.c.h.b16 %v583
    %v972 = vunpack.c.l.b16 %v584
    %v973 = vunpack.c.h.b16 %v584
    %v974 = vunpack.c.l.b16 %v585
    %v975 = vunpack.c.h.b16 %v585
    %v976 = vunpack.c.l.b16 %v586
    %v977 = vunpack.c.h.b16 %v586
    %v978 = vunpack.c.l.b16 %v587
    %v979 = vunpack.c.h.b16 %v587
    %v980 = vunpack.c.l.b16 %v588
    %v981 = vunpack.c.h.b16 %v588
    %v982 = vunpack.c.l.b16 %v589
    %v983 = vunpack.c.h.b16 %v589
    %v984 = vunpack.c.l.b16 %v590
    %v985 = vunpack.c.h.b16 %v590
    %v986 = vunpack.c.l.b16 %v591
    %v987 = vunpack.c.h.b16 %v591
    %v988 = vunpack.c.l.b16 %v592
    %v989 = vunpack.c.h.b16 %v592
    %v990 = vunpack.c.l.b16 %v593
    %v991 = vunpack.c.h.b16 %v593
    %v992 = vunpack.c.l.b16 %v594
    %v993 = vunpack.c.h.b16 %v594
    %v994 = vunpack.c.l.b16 %v595
    %v995 = vunpack.c.h.b16 %v595
    %v996 = vunpack.c.l.b16 %v596
    %v997 = vunpack.c.h.b16 %v596
    %v998 = vunpack.c.l.b16 %v597
    %v999 = vunpack.c.h.b16 %v597
    %v1000 = vunpack.c.l.b16 %v598
    %v1001 = vunpack.c.h.b16 %v598
    %v1002 = vunpack.c.l.b16 %v599
    %v1003 = vunpack.c.h.b16 %v599
    %v1004 = vunpack.c.l.b16 %v600
    %v1005 = vunpack.c.h.b16 %v600
    %v1006 = vunpack.c.l.b16 %v601
    %v1007 = vunpack.c.h.b16 %v601
    %v1008 = vpack.c.b16 %v756, %v752
    %v1009 = vpack.c.b16 %v757, %v753
    %v1010 = vpack.c.b16 %v758, %v754
    %v1011 = vpack.c.b16 %v759, %v755
    %v1012 = vpack.c.b16 %v764, %v760
    %v1013 = vpack.c.b16 %v765, %v761
    %v1014 = vpack.c.b16 %v766, %v762
    %v1015 = vpack.c.b16 %v767, %v763
    %v1016 = vpack.c.b16 %v772, %v768
    %v1017 = vpack.c.b16 %v773, %v769
    %v1018 = vpack.c.b16 %v774, %v770
    %v1019 = vpack.c.b16 %v775, %v771
    %v1020 = vpack.c.b16 %v780, %v776
    %v1021 = vpack.c.b16 %v781, %v777
    %v1022 = vpack.c.b16 %v782, %v778
    %v1023 = vpack.c.b16 %v783, %v779
    %v1024 = vpack.c.b16 %v788, %v784
    %v1025 = vpack.c.b16 %v789, %v785
    %v1026 = vpack.c.b16 %v790, %v786
    %v1027 = vpack.c.b16 %v791, %v787
    %v1028 = vpack.c.b16 %v796, %v792
    %v1029 = vpack.c.b16 %v797, %v793
    %v1030 = vpack.c.b16 %v798, %v794
    %v1031 = vpack.c.b16 %v799, %v795
    %v1032 = vpack.c.b16 %v804, %v800
    %v1033 = vpack.c.b16 %v805, %v801
    %v1034 = vpack.c.b16 %v806, %v802
    %v1035 = vpack.c.b16 %v807, %v803
    %v1036 = vpack.c.b16 %v812, %v808
    %v1037 = vpack.c.b16 %v813, %v809
    %v1038 = vpack.c.b16 %v814, %v810
    %v1039 = vpack.c.b16 %v815, %v811
    %v1040 = vpack.c.b16 %v820, %v816
    %v1041 = vpack.c.b16 %v821, %v817
    %v1042 = vpack.c.b16 %v822, %v818
    %v1043 = vpack.c.b16 %v823, %v819
    %v1044 = vpack.c.b16 %v828, %v824
    %v1045 = vpack.c.b16 %v829, %v825
    %v1046 = vpack.c.b16 %v830, %v826
    %v1047 = vpack.c.b16 %v831, %v827
    %v1048 = vpack.c.b16 %v836, %v832
    %v1049 = vpack.c.b16 %v837, %v833
    %v1050 = vpack.c.b16 %v838, %v834
    %v1051 = vpack.c.b16 %v839, %v835
    %v1052 = vpack.c.b16 %v844, %v840
    %v1053 = vpack.c.b16 %v845, %v841
    %v1054 = vpack.c.b16 %v846, %v842
    %v1055 = vpack.c.b16 %v847, %v843
    %v1056 = vpack.c.b16 %v852, %v848
    %v1057 = vpack.c.b16 %v853, %v849
    %v1058 = vpack.c.b16 %v854, %v850
    %v1059 = vpack.c.b16 %v855, %v851
    %v1060 = vpack.c.b16 %v860, %v856
    %v1061 = vpack.c.b16 %v861, %v857
    %v1062 = vpack.c.b16 %v862, %v858
    %v1063 = vpack.c.b16 %v863, %v859
    %v1064 = vpack.c.b16 %v868, %v864
    %v1065 = vpack.c.b16 %v869, %v865
    %v1066 = vpack.c.b16 %v870, %v866
    %v1067 = vpack.c.b16 %v871, %v867
    %v1068 = vpack.c.b16 %v876, %v872
    %v1069 = vpack.c.b16 %v877, %v873
    %v1070 = vpack.c.b16 %v878, %v874
    %v1071 = vpack.c.b16 %v879, %v875
    %v1072 = vpack.c.b16 %v884, %v880
    %v1073 = vpack.c.b16 %v885, %v881
    %v1074 = vpack.c.b16 %v886, %v882
    %v1075 = vpack.c.b16 %v887, %v883
    %v1076 = vpack.c.b16 %v892, %v888
    %v1077 = vpack.c.b16 %v893, %v889
    %v1078 = vpack.c.b16 %v894, %v890
    %v1079 = vpack.c.b16 %v895, %v891
    %v1080 = vpack.c.b16 %v900, %v896
    %v1081 = vpack.c.b16 %v901, %v897
    %v1082 = vpack.c.b16 %v902, %v898
    %v1083 = vpack.c.b16 %v903, %v899
    %v1084 = vpack.c.b16 %v908, %v904
    %v1085 = vpack.c.b16 %v909, %v905
    %v1086 = vpack.c.b16 %v910, %v906
    %v1087 = vpack.c.b16 %v911, %v907
    %v1088 = vpack.c.b16 %v916, %v912
    %v1089 = vpack.c.b16 %v917, %v913
    %v1090 = vpack.c.b16 %v918, %v914
    %v1091 = vpack.c.b16 %v919, %v915
    %v1092 = vpack.c.b16 %v924, %v920
    %v1093 = vpack.c.b16 %v925, %v921
    %v1094 = vpack.c.b16 %v926, %v922
    %v1095 = vpack.c.b16 %v927, %v923
    %v1096 = vpack.c.b16 %v932, %v928
    %v1097 = vpack.c.b16 %v933, %v929
    %v1098 = vpack.c.b16 %v934, %v930
    %v1099 = vpack.c.b16 %v935, %v931
    %v1100 = vpack.c.b16 %v940, %v936
    %v1101 = vpack.c.b16 %v941, %v937
    %v1102 = vpack.c.b16 %v942, %v938
    %v1103 = vpack.c.b16 %v943, %v939
    %v1104 = vpack.c.b16 %v948, %v944
    %v1105 = vpack.c.b16 %v949, %v945
    %v1106 = vpack.c.b16 %v950, %v946
    %v1107 = vpack.c.b16 %v951, %v947
    %v1108 = vpack.c.b16 %v956, %v952
    %v1109 = vpack.c.b16 %v957, %v953
    %v1110 = vpack.c.b16 %v958, %v954
    %v1111 = vpack.c.b16 %v959, %v955
    %v1112 = vpack.c.b16 %v964, %v960
    %v1113 = vpack.c.b16 %v965, %v961
    %v1114 = vpack.c.b16 %v966, %v962
    %v1115 = vpack.c.b16 %v967, %v963
    %v1116 = vpack.c.b16 %v972, %v968
    %v1117 = vpack.c.b16 %v973, %v969
    %v1118 = vpack.c.b16 %v974, %v970
    %v1119 = vpack.c.b16 %v975, %v971
    %v1120 = vpack.c.b16 %v980, %v976
    %v1121 = vpack.c.b16 %v981, %v977
    %v1122 = vpack.c.b16 %v982, %v978
    %v1123 = vpack.c.b16 %v983, %v979
    %v1124 = vpack.c.b16 %v988, %v984
    %v1125 = vpack.c.b16 %v989, %v985
    %v1126 = vpack.c.b16 %v990, %v986
    %v1127 = vpack.c.b16 %v991, %v987
    %v1128 = vpack.c.b16 %v996, %v992
    %v1129 = vpack.c.b16 %v997, %v993
    %v1130 = vpack.c.b16 %v998, %v994
    %v1131 = vpack.c.b16 %v999, %v995
    %v1132 = vpack.c.b16 %v1004, %v1000
    %v1133 = vpack.c.b16 %v1005, %v1001
    %v1134 = vpack.c.b16 %v1006, %v1002
    %v1135 = vpack.c.b16 %v1007, %v1003
    %1264 = vmatprep.subr.bf16.mxu0 %v1009
    %1265 = vmatpush1.bf16.msra.mxu0 %v1008
    %1266 = vmatprep.subr.bf16.mxu0 %v1013
    %1267 = vmatpush1.bf16.msra.mxu0 %v1012
    %1268 = vmatprep.subr.bf16.mxu0 %v1017
    %1269 = vmatpush1.bf16.msra.mxu0 %v1016
    %1270 = vmatprep.subr.bf16.mxu0 %v1021
    %1271 = vmatpush1.bf16.msra.mxu0 %v1020
    %1272 = vmatprep.subr.bf16.mxu0 %v1025
    %1273 = vmatpush1.bf16.msra.mxu0 %v1024
    %1274 = vmatprep.subr.bf16.mxu0 %v1029
    %1275 = vmatpush1.bf16.msra.mxu0 %v1028
    %1276 = vmatprep.subr.bf16.mxu0 %v1033
    %1277 = vmatpush1.bf16.msra.mxu0 %v1032
    %1278 = vmatprep.subr.bf16.mxu0 %v1037
    %1279 = vmatpush1.bf16.msra.mxu0 %v1036
    %1280 = vmatprep.subr.bf16.mxu0 %v1041
    %1281 = vmatpush1.bf16.msra.mxu0 %v1040
    %1282 = vmatprep.subr.bf16.mxu0 %v1045
    %1283 = vmatpush1.bf16.msra.mxu0 %v1044
    %1284 = vmatprep.subr.bf16.mxu0 %v1049
    %1285 = vmatpush1.bf16.msra.mxu0 %v1048
    %1286 = vmatprep.subr.bf16.mxu0 %v1053
    %1287 = vmatpush1.bf16.msra.mxu0 %v1052
    %1288 = vmatprep.subr.bf16.mxu0 %v1057
    %1289 = vmatpush1.bf16.msra.mxu0 %v1056
    %1290 = vmatprep.subr.bf16.mxu0 %v1061
    %1291 = vmatpush1.bf16.msra.mxu0 %v1060
    %1292 = vmatprep.subr.bf16.mxu0 %v1065
    %1293 = vmatpush1.bf16.msra.mxu0 %v1064
    %1294 = vmatprep.subr.bf16.mxu0 %v1069
    %1295 = vmatpush1.bf16.msra.mxu0 %v1068
    %1296 = vmatprep.mubr.bf16.mxu0 %v471
    %1297 = vmatmul.mubr.bf16.gmra.mrb[0].mxu0 %v470
    %v1298 = vpop.f32.mrb[0].mxu0
    %v1299 = vadd.f32 %v607, %v1298
    %v1300 = vpop.f32.mrb[0].mxu0
    %v1301 = vadd.f32 %v611, %v1300
    %v1302 = vpop.f32.mrb[0].mxu0
    %v1303 = vpop.f32.mrb[0].mxu0
    %1304 = vdwg.mxu0
    %1305 = vmatprep.subr.bf16.mxu0 %v1073
    %1306 = vmatpush1.bf16.msra.mxu0 %v1072
    %1307 = vmatprep.subr.bf16.mxu0 %v1077
    %1308 = vmatpush1.bf16.msra.mxu0 %v1076
    %1309 = vmatprep.subr.bf16.mxu0 %v1081
    %1310 = vmatpush1.bf16.msra.mxu0 %v1080
    %1311 = vmatprep.subr.bf16.mxu0 %v1085
    %1312 = vmatpush1.bf16.msra.mxu0 %v1084
    %1313 = vmatprep.subr.bf16.mxu0 %v1089
    %1314 = vmatpush1.bf16.msra.mxu0 %v1088
    %1315 = vmatprep.subr.bf16.mxu0 %v1093
    %1316 = vmatpush1.bf16.msra.mxu0 %v1092
    %1317 = vmatprep.subr.bf16.mxu0 %v1097
    %1318 = vmatpush1.bf16.msra.mxu0 %v1096
    %1319 = vmatprep.subr.bf16.mxu0 %v1101
    %1320 = vmatpush1.bf16.msra.mxu0 %v1100
    %1321 = vmatprep.subr.bf16.mxu0 %v1105
    %1322 = vmatpush1.bf16.msra.mxu0 %v1104
    %1323 = vmatprep.subr.bf16.mxu0 %v1109
    %1324 = vmatpush1.bf16.msra.mxu0 %v1108
    %1325 = vmatprep.subr.bf16.mxu0 %v1113
    %1326 = vmatpush1.bf16.msra.mxu0 %v1112
    %1327 = vmatprep.subr.bf16.mxu0 %v1117
    %1328 = vmatpush1.bf16.msra.mxu0 %v1116
    %1329 = vmatprep.subr.bf16.mxu0 %v1121
    %1330 = vmatpush1.bf16.msra.mxu0 %v1120
    %1331 = vmatprep.subr.bf16.mxu0 %v1125
    %1332 = vmatpush1.bf16.msra.mxu0 %v1124
    %1333 = vmatprep.subr.bf16.mxu0 %v1129
    %1334 = vmatpush1.bf16.msra.mxu0 %v1128
    %1335 = vmatprep.subr.bf16.mxu0 %v1133
    %1336 = vmatpush1.bf16.msra.mxu0 %v1132
    %1337 = vmatprep.mubr.bf16.mxu0 %v473
    %1338 = vmatmul.mubr.bf16.gmra.mrb[0].mxu0 %v472
    %v1339 = vpop.f32.mrb[0].mxu0
    %v1340 = vadd.f32 %v1299, %v1339
    %v1341 = vpop.f32.mrb[0].mxu0
    %v1342 = vadd.f32 %v1301, %v1341
    %v1343 = vpop.f32.mrb[0].mxu0
    %v1344 = vpop.f32.mrb[0].mxu0
    %1345 = vdwg.mxu0
    %1346 = vmatprep.subr.bf16.mxu0 %v1011
    %1347 = vmatpush1.bf16.msra.mxu0 %v1010
    %1348 = vmatprep.subr.bf16.mxu0 %v1015
    %1349 = vmatpush1.bf16.msra.mxu0 %v1014
    %1350 = vmatprep.subr.bf16.mxu0 %v1019
    %1351 = vmatpush1.bf16.msra.mxu0 %v1018
    %1352 = vmatprep.subr.bf16.mxu0 %v1023
    %1353 = vmatpush1.bf16.msra.mxu0 %v1022
    %1354 = vmatprep.subr.bf16.mxu0 %v1027
    %1355 = vmatpush1.bf16.msra.mxu0 %v1026
    %1356 = vmatprep.subr.bf16.mxu0 %v1031
    %1357 = vmatpush1.bf16.msra.mxu0 %v1030
    %1358 = vmatprep.subr.bf16.mxu0 %v1035
    %1359 = vmatpush1.bf16.msra.mxu0 %v1034
    %1360 = vmatprep.subr.bf16.mxu0 %v1039
    %1361 = vmatpush1.bf16.msra.mxu0 %v1038
    %1362 = vmatprep.subr.bf16.mxu0 %v1043
    %1363 = vmatpush1.bf16.msra.mxu0 %v1042
    %1364 = vmatprep.subr.bf16.mxu0 %v1047
    %1365 = vmatpush1.bf16.msra.mxu0 %v1046
    %1366 = vmatprep.subr.bf16.mxu0 %v1051
    %1367 = vmatpush1.bf16.msra.mxu0 %v1050
    %1368 = vmatprep.subr.bf16.mxu0 %v1055
    %1369 = vmatpush1.bf16.msra.mxu0 %v1054
    %1370 = vmatprep.subr.bf16.mxu0 %v1059
    %1371 = vmatpush1.bf16.msra.mxu0 %v1058
    %1372 = vmatprep.subr.bf16.mxu0 %v1063
    %1373 = vmatpush1.bf16.msra.mxu0 %v1062
    %1374 = vmatprep.subr.bf16.mxu0 %v1067
    %1375 = vmatpush1.bf16.msra.mxu0 %v1066
    %1376 = vmatprep.subr.bf16.mxu0 %v1071
    %1377 = vmatpush1.bf16.msra.mxu0 %v1070
    %1378 = vmatprep.mubr.bf16.mxu0 %v471
    %1379 = vmatmul.mubr.bf16.gmra.mrb[0].mxu0 %v470
    %v1380 = vpop.f32.mrb[0].mxu0
    %v1381 = vadd.f32 %v615, %v1380
    %v1382 = vpop.f32.mrb[0].mxu0
    %v1383 = vadd.f32 %v619, %v1382
    %v1384 = vpop.f32.mrb[0].mxu0
    %v1385 = vpop.f32.mrb[0].mxu0
    %1386 = vdwg.mxu0
    %1387 = vmatprep.subr.bf16.mxu0 %v1075
    %1388 = vmatpush1.bf16.msra.mxu0 %v1074
    %1389 = vmatprep.subr.bf16.mxu0 %v1079
    %1390 = vmatpush1.bf16.msra.mxu0 %v1078
    %1391 = vmatprep.subr.bf16.mxu0 %v1083
    %1392 = vmatpush1.bf16.msra.mxu0 %v1082
    %1393 = vmatprep.subr.bf16.mxu0 %v1087
    %1394 = vmatpush1.bf16.msra.mxu0 %v1086
    %1395 = vmatprep.subr.bf16.mxu0 %v1091
    %1396 = vmatpush1.bf16.msra.mxu0 %v1090
    %1397 = vmatprep.subr.bf16.mxu0 %v1095
    %1398 = vmatpush1.bf16.msra.mxu0 %v1094
    %1399 = vmatprep.subr.bf16.mxu0 %v1099
    %1400 = vmatpush1.bf16.msra.mxu0 %v1098
    %1401 = vmatprep.subr.bf16.mxu0 %v1103
    %1402 = vmatpush1.bf16.msra.mxu0 %v1102
    %1403 = vmatprep.subr.bf16.mxu0 %v1107
    %1404 = vmatpush1.bf16.msra.mxu0 %v1106
    %1405 = vmatprep.subr.bf16.mxu0 %v1111
    %1406 = vmatpush1.bf16.msra.mxu0 %v1110
    %1407 = vmatprep.subr.bf16.mxu0 %v1115
    %1408 = vmatpush1.bf16.msra.mxu0 %v1114
    %1409 = vmatprep.subr.bf16.mxu0 %v1119
    %1410 = vmatpush1.bf16.msra.mxu0 %v1118
    %1411 = vmatprep.subr.bf16.mxu0 %v1123
    %1412 = vmatpush1.bf16.msra.mxu0 %v1122
    %1413 = vmatprep.subr.bf16.mxu0 %v1127
    %1414 = vmatpush1.bf16.msra.mxu0 %v1126
    %1415 = vmatprep.subr.bf16.mxu0 %v1131
    %1416 = vmatpush1.bf16.msra.mxu0 %v1130
    %1417 = vmatprep.subr.bf16.mxu0 %v1135
    %1418 = vmatpush1.bf16.msra.mxu0 %v1134
    %1419 = vmatprep.mubr.bf16.mxu0 %v473
    %1420 = vmatmul.mubr.bf16.gmra.mrb[0].mxu0 %v472
    %v1421 = vpop.f32.mrb[0].mxu0
    %v1422 = vadd.f32 %v1381, %v1421
    %v1423 = vpop.f32.mrb[0].mxu0
    %v1424 = vadd.f32 %v1383, %v1423
    %v1425 = vpop.f32.mrb[0].mxu0
    %v1426 = vpop.f32.mrb[0].mxu0
    %1427 = vdwg.mxu0
    %v1428 = vmax.f32 %v1340, 0.0
    %v1429 = vmax.f32 %v1342, 0.0
    %v1430 = vmax.f32 %v1422, 0.0
    %v1431 = vmax.f32 %v1424, 0.0
    %v1432 = vpack.c.bf16 %v1428, %v1428
    %v1433 = vpack.c.bf16 %v1429, %v1429
    %v1434 = vpack.c.bf16 %v1430, %v1430
    %v1435 = vpack.c.bf16 %v1431, %v1431
    %v1436 = vld [vmem:[#allocation8] sm:$0xf]
    %v1437 = vld [vmem:[#allocation8 + $0x4] sm:$0xf]
    %v1438 = vld [vmem:[#allocation8 + $0x8] sm:$0xf]
    %v1439 = vld [vmem:[#allocation8 + $0xc] sm:$0xf]
    %v1440 = vld [vmem:[#allocation8 + $0x10] sm:$0xf]
    %v1441 = vld [vmem:[#allocation8 + $0x14] sm:$0xf]
    %v1442 = vld [vmem:[#allocation8 + $0x18] sm:$0xf]
    %v1443 = vld [vmem:[#allocation8 + $0x1c] sm:$0xf]
    %v1444 = vld [vmem:[#allocation8 + $0x20] sm:$0xf]
    %v1445 = vld [vmem:[#allocation8 + $0x24] sm:$0xf]
    %v1446 = vld [vmem:[#allocation8 + $0x28] sm:$0xf]
    %v1447 = vld [vmem:[#allocation8 + $0x2c] sm:$0xf]
    %v1448 = vld [vmem:[#allocation8 + $0x30] sm:$0xf]
    %v1449 = vld [vmem:[#allocation8 + $0x34] sm:$0xf]
    %v1450 = vld [vmem:[#allocation8 + $0x38] sm:$0xf]
    %v1451 = vld [vmem:[#allocation8 + $0x3c] sm:$0xf]
    %v1452 = vld [vmem:[#allocation8 + $0x40] sm:$0xf]
    %v1453 = vld [vmem:[#allocation8 + $0x44] sm:$0xf]
    %v1454 = vld [vmem:[#allocation8 + $0x48] sm:$0xf]
    %v1455 = vld [vmem:[#allocation8 + $0x4c] sm:$0xf]
    %v1456 = vld [vmem:[#allocation8 + $0x50] sm:$0xf]
    %v1457 = vld [vmem:[#allocation8 + $0x54] sm:$0xf]
    %v1458 = vld [vmem:[#allocation8 + $0x58] sm:$0xf]
    %v1459 = vld [vmem:[#allocation8 + $0x5c] sm:$0xf]
    %v1460 = vld [vmem:[#allocation8 + $0x60] sm:$0xf]
    %v1461 = vld [vmem:[#allocation8 + $0x64] sm:$0xf]
    %v1462 = vld [vmem:[#allocation8 + $0x68] sm:$0xf]
    %v1463 = vld [vmem:[#allocation8 + $0x6c] sm:$0xf]
    %v1464 = vld [vmem:[#allocation8 + $0x70] sm:$0xf]
    %v1465 = vld [vmem:[#allocation8 + $0x74] sm:$0xf]
    %v1466 = vld [vmem:[#allocation8 + $0x78] sm:$0xf]
    %v1467 = vld [vmem:[#allocation8 + $0x7c] sm:$0xf]
    %v1468 = vld [vmem:[#allocation8 + $0x80] sm:$0xf]
    %v1469 = vld [vmem:[#allocation8 + $0x84] sm:$0xf]
    %v1470 = vld [vmem:[#allocation8 + $0x88] sm:$0xf]
    %v1471 = vld [vmem:[#allocation8 + $0x8c] sm:$0xf]
    %v1472 = vld [vmem:[#allocation8 + $0x90] sm:$0xf]
    %v1473 = vld [vmem:[#allocation8 + $0x94] sm:$0xf]
    %v1474 = vld [vmem:[#allocation8 + $0x98] sm:$0xf]
    %v1475 = vld [vmem:[#allocation8 + $0x9c] sm:$0xf]
    %v1476 = vld [vmem:[#allocation8 + $0xa0] sm:$0xf]
    %v1477 = vld [vmem:[#allocation8 + $0xa4] sm:$0xf]
    %v1478 = vld [vmem:[#allocation8 + $0xa8] sm:$0xf]
    %v1479 = vld [vmem:[#allocation8 + $0xac] sm:$0xf]
    %v1480 = vld [vmem:[#allocation8 + $0xb0] sm:$0xf]
    %v1481 = vld [vmem:[#allocation8 + $0xb4] sm:$0xf]
    %v1482 = vld [vmem:[#allocation8 + $0xb8] sm:$0xf]
    %v1483 = vld [vmem:[#allocation8 + $0xbc] sm:$0xf]
    %v1484 = vld [vmem:[#allocation8 + $0xc0] sm:$0xf]
    %v1485 = vld [vmem:[#allocation8 + $0xc4] sm:$0xf]
    %v1486 = vld [vmem:[#allocation8 + $0xc8] sm:$0xf]
    %v1487 = vld [vmem:[#allocation8 + $0xcc] sm:$0xf]
    %v1488 = vld [vmem:[#allocation8 + $0xd0] sm:$0xf]
    %v1489 = vld [vmem:[#allocation8 + $0xd4] sm:$0xf]
    %v1490 = vld [vmem:[#allocation8 + $0xd8] sm:$0xf]
    %v1491 = vld [vmem:[#allocation8 + $0xdc] sm:$0xf]
    %v1492 = vld [vmem:[#allocation8 + $0xe0] sm:$0xf]
    %v1493 = vld [vmem:[#allocation8 + $0xe4] sm:$0xf]
    %v1494 = vld [vmem:[#allocation8 + $0xe8] sm:$0xf]
    %v1495 = vld [vmem:[#allocation8 + $0xec] sm:$0xf]
    %v1496 = vld [vmem:[#allocation8 + $0xf0] sm:$0xf]
    %v1497 = vld [vmem:[#allocation8 + $0xf4] sm:$0xf]
    %v1498 = vld [vmem:[#allocation8 + $0xf8] sm:$0xf]
    %v1499 = vld [vmem:[#allocation8 + $0xfc] sm:$0xf]
    %v1500 = vld [vmem:[%s8] sm:$0x1]
    %v1502 = vlaneseq
    %v1503 = vshrl.u32 %v1502, 7
    %v1504 = vsub.s32 0, %v1503
    %v1505 = vrot.slane %v1500, %v1504
    %v1571 = vunpack.c.l.b16 %v1436
    %v1572 = vunpack.c.l.b16 %v1437
    %v1573 = vunpack.c.l.b16 %v1438
    %v1574 = vunpack.c.l.b16 %v1439
    %v1575 = vunpack.c.l.b16 %v1440
    %v1576 = vunpack.c.l.b16 %v1441
    %v1577 = vunpack.c.l.b16 %v1442
    %v1578 = vunpack.c.l.b16 %v1443
    %v1579 = vunpack.c.l.b16 %v1444
    %v1580 = vunpack.c.l.b16 %v1445
    %v1581 = vunpack.c.l.b16 %v1446
    %v1582 = vunpack.c.l.b16 %v1447
    %v1583 = vunpack.c.l.b16 %v1448
    %v1584 = vunpack.c.l.b16 %v1449
    %v1585 = vunpack.c.l.b16 %v1450
    %v1586 = vunpack.c.l.b16 %v1451
    %v1587 = vunpack.c.l.b16 %v1452
    %v1588 = vunpack.c.l.b16 %v1453
    %v1589 = vunpack.c.l.b16 %v1454
    %v1590 = vunpack.c.l.b16 %v1455
    %v1591 = vunpack.c.l.b16 %v1456
    %v1592 = vunpack.c.l.b16 %v1457
    %v1593 = vunpack.c.l.b16 %v1458
    %v1594 = vunpack.c.l.b16 %v1459
    %v1595 = vunpack.c.l.b16 %v1460
    %v1596 = vunpack.c.l.b16 %v1461
    %v1597 = vunpack.c.l.b16 %v1462
    %v1598 = vunpack.c.l.b16 %v1463
    %v1599 = vunpack.c.l.b16 %v1464
    %v1600 = vunpack.c.l.b16 %v1465
    %v1601 = vunpack.c.l.b16 %v1466
    %v1602 = vunpack.c.l.b16 %v1467
    %v1603 = vunpack.c.l.b16 %v1468
    %v1604 = vunpack.c.l.b16 %v1469
    %v1605 = vunpack.c.l.b16 %v1470
    %v1606 = vunpack.c.l.b16 %v1471
    %v1607 = vunpack.c.l.b16 %v1472
    %v1608 = vunpack.c.l.b16 %v1473
    %v1609 = vunpack.c.l.b16 %v1474
    %v1610 = vunpack.c.l.b16 %v1475
    %v1611 = vunpack.c.l.b16 %v1476
    %v1612 = vunpack.c.l.b16 %v1477
    %v1613 = vunpack.c.l.b16 %v1478
    %v1614 = vunpack.c.l.b16 %v1479
    %v1615 = vunpack.c.l.b16 %v1480
    %v1616 = vunpack.c.l.b16 %v1481
    %v1617 = vunpack.c.l.b16 %v1482
    %v1618 = vunpack.c.l.b16 %v1483
    %v1619 = vunpack.c.l.b16 %v1484
    %v1620 = vunpack.c.l.b16 %v1485
    %v1621 = vunpack.c.l.b16 %v1486
    %v1622 = vunpack.c.l.b16 %v1487
    %v1623 = vunpack.c.l.b16 %v1488
    %v1624 = vunpack.c.l.b16 %v1489
    %v1625 = vunpack.c.l.b16 %v1490
    %v1626 = vunpack.c.l.b16 %v1491
    %v1627 = vunpack.c.l.b16 %v1492
    %v1628 = vunpack.c.l.b16 %v1493
    %v1629 = vunpack.c.l.b16 %v1494
    %v1630 = vunpack.c.l.b16 %v1495
    %v1631 = vunpack.c.l.b16 %v1496
    %v1632 = vunpack.c.l.b16 %v1497
    %v1633 = vunpack.c.l.b16 %v1498
    %v1634 = vunpack.c.l.b16 %v1499
    %v1635 = vpack.c.b16 %v1572, %v1571
    %v1636 = vpack.c.b16 %v1574, %v1573
    %v1637 = vpack.c.b16 %v1576, %v1575
    %v1638 = vpack.c.b16 %v1578, %v1577
    %v1639 = vpack.c.b16 %v1580, %v1579
    %v1640 = vpack.c.b16 %v1582, %v1581
    %v1641 = vpack.c.b16 %v1584, %v1583
    %v1642 = vpack.c.b16 %v1586, %v1585
    %v1643 = vpack.c.b16 %v1588, %v1587
    %v1644 = vpack.c.b16 %v1590, %v1589
    %v1645 = vpack.c.b16 %v1592, %v1591
    %v1646 = vpack.c.b16 %v1594, %v1593
    %v1647 = vpack.c.b16 %v1596, %v1595
    %v1648 = vpack.c.b16 %v1598, %v1597
    %v1649 = vpack.c.b16 %v1600, %v1599
    %v1650 = vpack.c.b16 %v1602, %v1601
    %v1651 = vpack.c.b16 %v1604, %v1603
    %v1652 = vpack.c.b16 %v1606, %v1605
    %v1653 = vpack.c.b16 %v1608, %v1607
    %v1654 = vpack.c.b16 %v1610, %v1609
    %v1655 = vpack.c.b16 %v1612, %v1611
    %v1656 = vpack.c.b16 %v1614, %v1613
    %v1657 = vpack.c.b16 %v1616, %v1615
    %v1658 = vpack.c.b16 %v1618, %v1617
    %v1659 = vpack.c.b16 %v1620, %v1619
    %v1660 = vpack.c.b16 %v1622, %v1621
    %v1661 = vpack.c.b16 %v1624, %v1623
    %v1662 = vpack.c.b16 %v1626, %v1625
    %v1663 = vpack.c.b16 %v1628, %v1627
    %v1664 = vpack.c.b16 %v1630, %v1629
    %v1665 = vpack.c.b16 %v1632, %v1631
    %v1666 = vpack.c.b16 %v1634, %v1633
    %1699 = vmatprep.subr.bf16.mxu0 0
    %1700 = vmatpush1.bf16.msra.mxu0 %v1635
    %1701 = vmatprep.subr.bf16.mxu0 0
    %1702 = vmatpush1.bf16.msra.mxu0 %v1636
    %1703 = vmatprep.subr.bf16.mxu0 0
    %1704 = vmatpush1.bf16.msra.mxu0 %v1637
    %1705 = vmatprep.subr.bf16.mxu0 0
    %1706 = vmatpush1.bf16.msra.mxu0 %v1638
    %1707 = vmatprep.subr.bf16.mxu0 0
    %1708 = vmatpush1.bf16.msra.mxu0 %v1639
    %1709 = vmatprep.subr.bf16.mxu0 0
    %1710 = vmatpush1.bf16.msra.mxu0 %v1640
    %1711 = vmatprep.subr.bf16.mxu0 0
    %1712 = vmatpush1.bf16.msra.mxu0 %v1641
    %1713 = vmatprep.subr.bf16.mxu0 0
    %1714 = vmatpush1.bf16.msra.mxu0 %v1642
    %1715 = vmatprep.subr.bf16.mxu0 0
    %1716 = vmatpush1.bf16.msra.mxu0 %v1643
    %1717 = vmatprep.subr.bf16.mxu0 0
    %1718 = vmatpush1.bf16.msra.mxu0 %v1644
    %1719 = vmatprep.subr.bf16.mxu0 0
    %1720 = vmatpush1.bf16.msra.mxu0 %v1645
    %1721 = vmatprep.subr.bf16.mxu0 0
    %1722 = vmatpush1.bf16.msra.mxu0 %v1646
    %1723 = vmatprep.subr.bf16.mxu0 0
    %1724 = vmatpush1.bf16.msra.mxu0 %v1647
    %1725 = vmatprep.subr.bf16.mxu0 0
    %1726 = vmatpush1.bf16.msra.mxu0 %v1648
    %1727 = vmatprep.subr.bf16.mxu0 0
    %1728 = vmatpush1.bf16.msra.mxu0 %v1649
    %1729 = vmatprep.subr.bf16.mxu0 0
    %1730 = vmatpush1.bf16.msra.mxu0 %v1650
    %1731 = vmatprep.mubr.bf16.mxu0 %v1433
    %1732 = vmatmul.mubr.bf16.gmra.mrb[0].mxu0 %v1432
    %v1733 = vpop.f32.mrb[0].mxu0
    %v1734 = vadd.f32 %v1505, %v1733
    %v1735 = vpop.f32.mrb[0].mxu0
    %v1736 = vpop.f32.mrb[0].mxu0
    %v1737 = vpop.f32.mrb[0].mxu0
    %1738 = vdwg.mxu0
    %1739 = vmatprep.subr.bf16.mxu0 0
    %1740 = vmatpush1.bf16.msra.mxu0 %v1651
    %1741 = vmatprep.subr.bf16.mxu0 0
    %1742 = vmatpush1.bf16.msra.mxu0 %v1652
    %1743 = vmatprep.subr.bf16.mxu0 0
    %1744 = vmatpush1.bf16.msra.mxu0 %v1653
    %1745 = vmatprep.subr.bf16.mxu0 0
    %1746 = vmatpush1.bf16.msra.mxu0 %v1654
    %1747 = vmatprep.subr.bf16.mxu0 0
    %1748 = vmatpush1.bf16.msra.mxu0 %v1655
    %1749 = vmatprep.subr.bf16.mxu0 0
    %1750 = vmatpush1.bf16.msra.mxu0 %v1656
    %1751 = vmatprep.subr.bf16.mxu0 0
    %1752 = vmatpush1.bf16.msra.mxu0 %v1657
    %1753 = vmatprep.subr.bf16.mxu0 0
    %1754 = vmatpush1.bf16.msra.mxu0 %v1658
    %1755 = vmatprep.subr.bf16.mxu0 0
    %1756 = vmatpush1.bf16.msra.mxu0 %v1659
    %1757 = vmatprep.subr.bf16.mxu0 0
    %1758 = vmatpush1.bf16.msra.mxu0 %v1660
    %1759 = vmatprep.subr.bf16.mxu0 0
    %1760 = vmatpush1.bf16.msra.mxu0 %v1661
    %1761 = vmatprep.subr.bf16.mxu0 0
    %1762 = vmatpush1.bf16.msra.mxu0 %v1662
    %1763 = vmatprep.subr.bf16.mxu0 0
    %1764 = vmatpush1.bf16.msra.mxu0 %v1663
    %1765 = vmatprep.subr.bf16.mxu0 0
    %1766 = vmatpush1.bf16.msra.mxu0 %v1664
    %1767 = vmatprep.subr.bf16.mxu0 0
    %1768 = vmatpush1.bf16.msra.mxu0 %v1665
    %1769 = vmatprep.subr.bf16.mxu0 0
    %1770 = vmatpush1.bf16.msra.mxu0 %v1666
    %1771 = vmatprep.mubr.bf16.mxu0 %v1435
    %1772 = vmatmul.mubr.bf16.gmra.mrb[0].mxu0 %v1434
    %v1773 = vpop.f32.mrb[0].mxu0
    %v1774 = vadd.f32 %v1734, %v1773
    %v1775 = vpop.f32.mrb[0].mxu0
    %v1776 = vpop.f32.mrb[0].mxu0
    %v1777 = vpop.f32.mrb[0].mxu0
    %1778 = vdwg.mxu0
    %1779 = vst [vmem:[#allocation10] sm:$0xff] %v1774
    // Predicated region
    $region54: #{tpu_custom_call.1} parent=1 // pred_check
      _
    $region55: #{tpu_custom_call.1} parent=1 // pred_check_branch
      %1781 = sbr.rel (0) target = $region57
    $region56: #{tpu_custom_call.1} parent=1 // pred_region
      %s1783 = ssub.s32 128, 128
      %1784 = vsyncadd [#allocation4], %s1783
      %s1786 = sshll.u32 [#allocation10], 4
      %s1787 = int_to_ptr.vmem [resolvable:$true] %s1786
      %1789 = dma.vmem_to_hbm [thread:$0]  %s1787, 128, %s9, [#allocation4]
    $region57: #{tpu_custom_call.1} parent=1 // pred_fallthru
      _
    // Predicated region
    $region58: #{tpu_custom_call.1} parent=1 // pred_check
      _
    $region59: #{tpu_custom_call.1} parent=1 // pred_check_branch
      %1791 = sbr.rel (0) target = $region61
    $region60: #{tpu_custom_call.1} parent=1 // pred_region
      %1792 = dma.done [#allocation4], 128
    $region61: #{tpu_custom_call.1} parent=1 // pred_fallthru
      _
    %1793 = vsyncpa [#allocation3], 1
    %1794 = vsyncpa [#allocation6], 1
    %1795 = vsyncpa [#allocation9], 1
    %1796 = vsyncpa [#allocation4], 1

</llo_original>
